<compile_context>
chip_gen: v7x
topology: tpu7x:2x2x1
jax: 0.10.0
libtpu: 0.0.40
codegen_flags: <defaults>
</compile_context>

<pallas_src>
import functools

import jax
import jax.numpy as jnp
import numpy as np
from jax import lax
from jax.experimental import pallas as pl
from jax.experimental.pallas import tpu as pltpu


def _round_up(x, m):
    return (x + m - 1) // m * m


# ---------------------------------------------------------------------------
# Kernel: one (batch_block, time_chunk) grid step of the LSTM recurrence.
# ---------------------------------------------------------------------------
def lstm_chunk_kernel(len_ref, zx_ref, whh_ref, h_ref, c_ref, *, unroll):
    """
    len_ref: (Bb, 1) int32        per-row sequence lengths
    zx_ref:  (Tc, Bb, 4*Hs)       precomputed x @ W_ih + bias for this time chunk
                                  (streamed; possibly bf16)
    whh_ref: (Hs, 4*Hs)           recurrent weights, gate-major, lane-aligned (resident)
    h_ref, c_ref: (Bb, Hs) f32    outputs, used directly as the recurrence carry
    """
    chunk = pl.program_id(1)
    Tc = zx_ref.shape[0]
    Hs = h_ref.shape[1]                       # per-gate stride (multiple of 128)

    @pl.when(chunk == 0)
    def _init():
        h_ref[...] = jnp.zeros_like(h_ref)
        c_ref[...] = jnp.zeros_like(c_ref)

    t0 = chunk * Tc
    lens = len_ref[...]                       # (Bb, 1) int32
    whh = whh_ref[...]                        # hoisted: constant across the chunk
    mm_dtype = whh.dtype

    def sigm(x):
        # sigmoid via tanh: one EUP op (+2 cheap VPU ops) instead of exp + reciprocal.
        return 0.5 * jnp.tanh(0.5 * x) + 0.5

    def step(s, carry):
        h, c = carry
        t = t0 + s
        # Only the recurrent matmul stays inside the serial chain; f32 accumulation.
        z = zx_ref[s].astype(jnp.float32) + jnp.dot(
            h.astype(mm_dtype), whh, preferred_element_type=jnp.float32)  # (Bb, 4Hs)
        # Gate slices are lane-aligned (Hs is a multiple of 128). PyTorch order [i,f,g,o].
        i_g = sigm(z[:, 0 * Hs:1 * Hs])
        f_g = sigm(z[:, 1 * Hs:2 * Hs])
        g_g = jnp.tanh(z[:, 2 * Hs:3 * Hs])
        o_g = sigm(z[:, 3 * Hs:4 * Hs])
        c_new = f_g * c + i_g * g_g
        h_new = o_g * jnp.tanh(c_new)
        # Packed-sequence semantics: freeze rows whose length is exceeded (single select).
        upd = t < lens
        return jnp.where(upd, h_new, h), jnp.where(upd, c_new, c)

    h_f, c_f = lax.fori_loop(0, Tc, step, (h_ref[...], c_ref[...]), unroll=unroll)
    h_ref[...] = h_f
    c_ref[...] = c_f


# ---------------------------------------------------------------------------
# One-time weight re-layout (hoisted out of the per-call jitted path).
# ---------------------------------------------------------------------------
def prepare_params(params, *, matmul_dtype=jnp.float32):
    """Gate-major, lane-aligned layout: gate k occupies columns [k*Hs, k*Hs+H).

    Correctness of the padded lanes: padded W_ih / bias columns and padded W_hh *rows*
    are exactly zero, so junk in padded h/c lanes can never leak into real lanes, and
    the final [:H] slice discards the pads regardless.
    """
    emb = params["embedding"]                 # (V, E)
    wih_t = params["w_ih_t"]                  # (E, 4H)
    whh_t = params["w_hh_t"]                  # (H, 4H)
    bias = params["bias"]                     # (1, 4H)
    H = whh_t.shape[0]
    # TODO(synk): for H < 128 a contiguous (un-padded) 4H gate layout would avoid the
    # 128/H Zx inflation; per-gate lane alignment is kept because it makes every gate
    # slice / output store lane-dense and sub-128 hidden sizes are toy-scale.
    Hs = H if H % 128 == 0 else _round_up(H, 128)
    G = 4 * Hs

    def gate_major_pad(w, rows_out):
        rows_in = w.shape[0]
        out = jnp.zeros((rows_out, G), jnp.float32)
        for k in range(4):
            out = out.at[:rows_in, k * Hs:k * Hs + H].set(
                w[:, k * H:(k + 1) * H].astype(jnp.float32))
        return out

    return {
        "emb_table": emb.astype(matmul_dtype),                                 # (V, E)
        "wih_p": gate_major_pad(wih_t, wih_t.shape[0]).astype(matmul_dtype),   # (E, 4Hs)
        "whh_p": gate_major_pad(whh_t, Hs).astype(matmul_dtype),               # (Hs, 4Hs)
        "bias_p": gate_major_pad(bias, 1),                                     # (1, 4Hs) f32
    }


# ---------------------------------------------------------------------------
# Forward wrapper.
# ---------------------------------------------------------------------------
def encoder_forward(src, lengths, prepared, *, hid_size, time_chunk=None,
                    batch_block=None, vmem_budget_bytes=48 * 1024 * 1024):
    """src: (B, T) int32 token ids, lengths: (B,) int32. Returns (None, (h_n, c_n))."""
    emb_table = prepared["emb_table"]
    wih_p = prepared["wih_p"]
    whh_p = prepared["whh_p"]
    bias_p = prepared["bias_p"]

    B, T = src.shape
    H = hid_size
    Hs, G = whh_p.shape
    mm_dtype = whh_p.dtype
    zx_dtype = mm_dtype                      # stream Zx at the matmul dtype
    zx_item = jnp.dtype(zx_dtype).itemsize

    # Batch block: fill the MXU M dimension, keep >=2 blocks for megacore when B allows.
    if batch_block is None:
        Bb = min(_round_up(B, 8), 128)
        if B > 8 and _round_up(B, Bb) // Bb < 2:
            Bb = max(8, _round_up((B + 1) // 2, 8))
    else:
        Bb = max(8, _round_up(batch_block, 8))
    Bp = _round_up(max(B, Bb), Bb)

    # Time chunk: target ~1 MiB Zx chunk DMAs, shrink to the (conservative) VMEM budget.
    if time_chunk is None:
        Tc = max(1, min(T, (1 << 20) // max(1, Bb * G * zx_item)))
    else:
        Tc = max(1, min(time_chunk, T))
    whh_bytes = Hs * G * jnp.dtype(mm_dtype).itemsize
    fixed_bytes = whh_bytes + 4 * Bb * Hs * 4 + 4 * Bb * 4 + (256 << 10)
    while Tc > 1 and fixed_bytes + 2 * Tc * Bb * G * zx_item > vmem_budget_bytes:
        Tc = max(1, Tc // 2)
    Tp = _round_up(T, Tc)
    vmem_limit = int(min(max(2 * (fixed_bytes + 2 * Tc * Bb * G * zx_item),
                             32 << 20), 56 << 20))

    # Hoisted input projection: time-major embedding gather (no hidden transpose of the
    # big Zx tensor) -> one MXU matmul for all timesteps -> store at streaming dtype.
    mm_precision = (lax.Precision.HIGHEST if mm_dtype == jnp.float32
                    else lax.Precision.DEFAULT)
    emb_tm = jnp.take(emb_table, src.T, axis=0)                       # (T, B, E)
    zx = jnp.einsum("tbe,eg->tbg", emb_tm, wih_p,
                    preferred_element_type=jnp.float32,
                    precision=mm_precision) + bias_p                  # (T, B, 4Hs) f32
    zx = zx.astype(zx_dtype)
    zx = jnp.pad(zx, ((0, Tp - T), (0, Bp - B), (0, 0)))              # (Tp, Bp, 4Hs)

    len_p = jnp.zeros((Bp, 1), jnp.int32).at[:B, 0].set(lengths.astype(jnp.int32))

    n_bblocks = Bp // Bb
    n_chunks = Tp // Tc
    unroll = min(Tc, 8) if Bb <= 32 else min(Tc, 2)   # deep unroll only at low vreg pressure
    kernel = functools.partial(lstm_chunk_kernel, unroll=unroll)

    h_p, c_p = pl.pallas_call(
        kernel,
        out_shape=(jax.ShapeDtypeStruct((Bp, Hs), jnp.float32),
                   jax.ShapeDtypeStruct((Bp, Hs), jnp.float32)),
        grid_spec=pltpu.PrefetchScalarGridSpec(
            num_scalar_prefetch=0,
            grid=(n_bblocks, n_chunks),               # batch parallel, time serial (last)
            in_specs=[
                pl.BlockSpec((Bb, 1), lambda b, c: (b, 0)),           # lengths
                pl.BlockSpec((Tc, Bb, G), lambda b, c: (c, b, 0)),    # Zx chunk (streamed)
                pl.BlockSpec((Hs, G), lambda b, c: (0, 0)),           # W_hh (resident)
            ],
            out_specs=[
                pl.BlockSpec((Bb, Hs), lambda b, c: (b, 0)),          # h carry / output
                pl.BlockSpec((Bb, Hs), lambda b, c: (b, 0)),          # c carry / output
            ],
        ),
        compiler_params=pltpu.CompilerParams(
            dimension_semantics=("parallel", "arbitrary"),
            vmem_limit_bytes=vmem_limit),
    )(len_p, zx, whh_p)

    h_n = h_p[:B, :H]
    c_n = c_p[:B, :H]
    # PyTorch returns hidden with a leading num_layers dim (= 1).
    return None, (h_n[None, :, :], c_n[None, :, :])


# ---------------------------------------------------------------------------
# Pure-JAX reference (lax.scan) for correctness checks.
# ---------------------------------------------------------------------------
def encoder_reference(src, lengths, params):
    emb_table = params["embedding"]
    wih_t, whh_t, bias = params["w_ih_t"], params["w_hh_t"], params["bias"]
    B, T = src.shape
    H = whh_t.shape[0]
    emb_tm = jnp.transpose(jnp.take(emb_table, src, axis=0), (1, 0, 2))
    hp = lax.Precision.HIGHEST

    def step(carry, inp):
        h, c = carry
        x_t, t = inp
        z = (jnp.dot(x_t, wih_t, precision=hp)
             + jnp.dot(h, whh_t, precision=hp) + bias)
        i = jax.nn.sigmoid(z[:, :H])
        f = jax.nn.sigmoid(z[:, H:2 * H])
        g = jnp.tanh(z[:, 2 * H:3 * H])
        o = jax.nn.sigmoid(z[:, 3 * H:])
        c_new = f * c + i * g
        h_new = o * jnp.tanh(c_new)
        m = (t < lengths)[:, None]
        return (jnp.where(m, h_new, h), jnp.where(m, c_new, c)), None

    (h, c), _ = lax.scan(
        step,
        (jnp.zeros((B, H), jnp.float32), jnp.zeros((B, H), jnp.float32)),
        (emb_tm, jnp.arange(T)))
    return h[None], c[None]


def init_params(key, vocab_size, emb_size, hid_size):
    k_emb, k_wih, k_whh, k_bih, k_bhh = jax.random.split(key, 5)
    bound = 1.0 / np.sqrt(hid_size)
    embedding = jax.random.normal(k_emb, (vocab_size, emb_size), jnp.float32)
    w_ih = jax.random.uniform(k_wih, (4 * hid_size, emb_size), jnp.float32, -bound, bound)
    w_hh = jax.random.uniform(k_whh, (4 * hid_size, hid_size), jnp.float32, -bound, bound)
    b_ih = jax.random.uniform(k_bih, (4 * hid_size,), jnp.float32, -bound, bound)
    b_hh = jax.random.uniform(k_bhh, (4 * hid_size,), jnp.float32, -bound, bound)
    return {
        "embedding": embedding,
        "w_ih_t": w_ih.T,                       # (E, 4H)
        "w_hh_t": w_hh.T,                       # (H, 4H)
        "bias": (b_ih + b_hh).reshape(1, -1),   # (1, 4H)
    }


if __name__ == "__main__":
    VOCAB, EMB, HID = 50, 16, 32
    B, T = 4, 8

    key = jax.random.PRNGKey(0)
    k_par, k_src = jax.random.split(key)
    params = init_params(k_par, VOCAB, EMB, HID)

    src = jax.random.randint(k_src, (B, T), 0, VOCAB, dtype=jnp.int32)
    lengths = jnp.array([8, 5, 3, 6], dtype=jnp.int32)   # enforce_sorted=False OK

    h_ref, c_ref = encoder_reference(src, lengths, params)

    # f32 configuration (reference-parity check). time_chunk=4 -> 2 time chunks, so the
    # cross-chunk VMEM-resident carry is exercised.
    prep32 = prepare_params(params, matmul_dtype=jnp.float32)
    fwd32 = jax.jit(functools.partial(encoder_forward, hid_size=HID, time_chunk=4))
    _, (h32, c32) = fwd32(src, lengths, prep32)
    h32 = jax.block_until_ready(h32)
    c32 = jax.block_until_ready(c32)
    np.testing.assert_allclose(np.asarray(h32), np.asarray(h_ref), rtol=5e-5, atol=5e-5)
    np.testing.assert_allclose(np.asarray(c32), np.asarray(c_ref), rtol=5e-5, atol=5e-5)

    # bf16 configuration (MXU-rate matmuls, bf16-streamed Zx / resident W_hh; f32 carry)
    # with a looser tolerance, per review.
    prep16 = prepare_params(params, matmul_dtype=jnp.bfloat16)
    fwd16 = jax.jit(functools.partial(encoder_forward, hid_size=HID))
    _, (h16, c16) = fwd16(src, lengths, prep16)
    h16 = jax.block_until_ready(h16)
    c16 = jax.block_until_ready(c16)
    np.testing.assert_allclose(np.asarray(h16), np.asarray(h_ref), rtol=5e-2, atol=5e-2)
    np.testing.assert_allclose(np.asarray(c16), np.asarray(c_ref), rtol=5e-2, atol=5e-2)

    print("KERNEL_OK")
</pallas_src>

<mosaic_0001>
module attributes {stable_mosaic.version = 11 : i64} {
  func.func @lstm_chunk_kernel(%arg0: i32, %arg1: i32, %arg2: memref<8x1xi32, #tpu.memory_space<vmem>>, %arg3: memref<4x8x512xf32, #tpu.memory_space<vmem>>, %arg4: memref<128x512xf32, #tpu.memory_space<vmem>>, %arg5: memref<8x128xf32, #tpu.memory_space<vmem>>, %arg6: memref<8x128xf32, #tpu.memory_space<vmem>>) attributes {dimension_semantics = [#tpu.dimension_semantics<parallel>, #tpu.dimension_semantics<arbitrary>], iteration_bounds = array<i64: 1, 2>, scalar_prefetch = 0 : i64, scratch_operands = 0 : i64, tpu.core_type = #tpu.core_type<tc>, window_params = [{transform_indices = @transform_0, window_bounds = array<i64: 8, 1>}, {transform_indices = @transform_1, window_bounds = array<i64: 4, 8, 512>}, {pipeline_mode = #tpu.pipeline_mode<synchronous>, transform_indices = @transform_2, window_bounds = array<i64: 128, 512>}, {transform_indices = @transform_3, window_bounds = array<i64: 8, 128>}, {transform_indices = @transform_4, window_bounds = array<i64: 8, 128>}]} {
    %c0_i32 = arith.constant 0 : i32
    %0 = arith.cmpi eq, %arg1, %c0_i32 : i32
    %1 = arith.extui %0 : i1 to i32
    %c0_i32_0 = arith.constant 0 : i32
    %2 = arith.cmpi ne, %1, %c0_i32_0 : i32
    scf.if %2 {
      %cst_61 = arith.constant 0.000000e+00 : f32
      %190 = vector.broadcast %cst_61 : f32 to vector<8x128xf32>
      %c0_62 = arith.constant 0 : index
      %c0_63 = arith.constant 0 : index
      %191 = vector.load %arg5[%c0_62, %c0_63] : memref<8x128xf32, #tpu.memory_space<vmem>>, vector<8x128xf32>
      tpu.vector_store %arg5[%c0_62, %c0_63], %190 {strides = array<i32>} : memref<8x128xf32, #tpu.memory_space<vmem>>, vector<8x128xf32>,
      %cst_64 = arith.constant 0.000000e+00 : f32
      %192 = vector.broadcast %cst_64 : f32 to vector<8x128xf32>
      %c0_65 = arith.constant 0 : index
      %c0_66 = arith.constant 0 : index
      %193 = vector.load %arg6[%c0_65, %c0_66] : memref<8x128xf32, #tpu.memory_space<vmem>>, vector<8x128xf32>
      tpu.vector_store %arg6[%c0_65, %c0_66], %192 {strides = array<i32>} : memref<8x128xf32, #tpu.memory_space<vmem>>, vector<8x128xf32>,
    } else {
    }
    %c4_i32 = arith.constant 4 : i32
    %3 = arith.muli %arg1, %c4_i32 : i32
    %c0 = arith.constant 0 : index
    %c0_1 = arith.constant 0 : index
    %4 = vector.load %arg2[%c0, %c0_1] : memref<8x1xi32, #tpu.memory_space<vmem>>, vector<8x1xi32>
    %c0_2 = arith.constant 0 : index
    %c0_3 = arith.constant 0 : index
    %5 = vector.load %arg4[%c0_2, %c0_3] : memref<128x512xf32, #tpu.memory_space<vmem>>, vector<128x512xf32>
    %c0_4 = arith.constant 0 : index
    %c0_5 = arith.constant 0 : index
    %6 = vector.load %arg5[%c0_4, %c0_5] : memref<8x128xf32, #tpu.memory_space<vmem>>, vector<8x128xf32>
    %c0_6 = arith.constant 0 : index
    %c0_7 = arith.constant 0 : index
    %7 = vector.load %arg6[%c0_6, %c0_7] : memref<8x128xf32, #tpu.memory_space<vmem>>, vector<8x128xf32>
    %c0_i32_8 = arith.constant 0 : i32
    %8 = arith.addi %3, %c0_i32_8 : i32
    %9 = arith.index_cast %c0_i32_8 : i32 to index
    %c0_9 = arith.constant 0 : index
    %c0_10 = arith.constant 0 : index
    %10 = vector.load %arg3[%9, %c0_9, %c0_10] : memref<4x8x512xf32, #tpu.memory_space<vmem>>, vector<1x8x512xf32>
    %11 = vector.shape_cast %10 : vector<1x8x512xf32> to vector<8x512xf32>
    %cst = arith.constant dense<0.000000e+00> : vector<8x512xf32>
    %12 = tpu.matmul %6, %5, %cst {dimension_numbers = #tpu.dot_dimension_numbers<[1], [0], [0], [1], [0, 0, 1, 1], [], []>} : vector<8x128xf32>, vector<128x512xf32>, vector<8x512xf32> -> vector<8x512xf32>
    %13 = arith.addf %11, %12 : vector<8x512xf32>
    %14 = vector.extract_strided_slice %13 {offsets = [0, 0], sizes = [8, 128], strides = [1, 1]} : vector<8x512xf32> to vector<8x128xf32>
    %cst_11 = arith.constant 5.000000e-01 : f32
    %15 = vector.broadcast %cst_11 : f32 to vector<8x128xf32>
    %16 = arith.mulf %15, %14 : vector<8x128xf32>
    %17 = math.tanh %16 : vector<8x128xf32>
    %cst_12 = arith.constant 5.000000e-01 : f32
    %18 = vector.broadcast %cst_12 : f32 to vector<8x128xf32>
    %19 = arith.mulf %18, %17 : vector<8x128xf32>
    %cst_13 = arith.constant 5.000000e-01 : f32
    %20 = vector.broadcast %cst_13 : f32 to vector<8x128xf32>
    %21 = arith.addf %19, %20 : vector<8x128xf32>
    %22 = vector.extract_strided_slice %13 {offsets = [0, 128], sizes = [8, 128], strides = [1, 1]} : vector<8x512xf32> to vector<8x128xf32>
    %cst_14 = arith.constant 5.000000e-01 : f32
    %23 = vector.broadcast %cst_14 : f32 to vector<8x128xf32>
    %24 = arith.mulf %23, %22 : vector<8x128xf32>
    %25 = math.tanh %24 : vector<8x128xf32>
    %cst_15 = arith.constant 5.000000e-01 : f32
    %26 = vector.broadcast %cst_15 : f32 to vector<8x128xf32>
    %27 = arith.mulf %26, %25 : vector<8x128xf32>
    %cst_16 = arith.constant 5.000000e-01 : f32
    %28 = vector.broadcast %cst_16 : f32 to vector<8x128xf32>
    %29 = arith.addf %27, %28 : vector<8x128xf32>
    %30 = vector.extract_strided_slice %13 {offsets = [0, 256], sizes = [8, 128], strides = [1, 1]} : vector<8x512xf32> to vector<8x128xf32>
    %31 = math.tanh %30 : vector<8x128xf32>
    %32 = vector.extract_strided_slice %13 {offsets = [0, 384], sizes = [8, 128], strides = [1, 1]} : vector<8x512xf32> to vector<8x128xf32>
    %cst_17 = arith.constant 5.000000e-01 : f32
    %33 = vector.broadcast %cst_17 : f32 to vector<8x128xf32>
    %34 = arith.mulf %33, %32 : vector<8x128xf32>
    %35 = math.tanh %34 : vector<8x128xf32>
    %cst_18 = arith.constant 5.000000e-01 : f32
    %36 = vector.broadcast %cst_18 : f32 to vector<8x128xf32>
    %37 = arith.mulf %36, %35 : vector<8x128xf32>
    %cst_19 = arith.constant 5.000000e-01 : f32
    %38 = vector.broadcast %cst_19 : f32 to vector<8x128xf32>
    %39 = arith.addf %37, %38 : vector<8x128xf32>
    %40 = arith.mulf %29, %7 : vector<8x128xf32>
    %41 = arith.mulf %21, %31 : vector<8x128xf32>
    %42 = arith.addf %40, %41 : vector<8x128xf32>
    %43 = math.tanh %42 : vector<8x128xf32>
    %44 = arith.mulf %39, %43 : vector<8x128xf32>
    %45 = vector.broadcast %8 : i32 to vector<8x1xi32>
    %46 = arith.cmpi slt, %45, %4 : vector<8x1xi32>
    %47 = vector.shape_cast %46 : vector<8x1xi1> to vector<8x1xi1>
    %48 = vector.broadcast %47 : vector<8x1xi1> to vector<8x128xi1>
    %49 = arith.select %48, %44, %6 : vector<8x128xi1>, vector<8x128xf32>
    %50 = vector.shape_cast %46 : vector<8x1xi1> to vector<8x1xi1>
    %51 = vector.broadcast %50 : vector<8x1xi1> to vector<8x128xi1>
    %52 = arith.select %51, %42, %7 : vector<8x128xi1>, vector<8x128xf32>
    %c1_i32 = arith.constant 1 : i32
    %53 = arith.addi %3, %c1_i32 : i32
    %54 = arith.index_cast %c1_i32 : i32 to index
    %c0_20 = arith.constant 0 : index
    %c0_21 = arith.constant 0 : index
    %55 = vector.load %arg3[%54, %c0_20, %c0_21] : memref<4x8x512xf32, #tpu.memory_space<vmem>>, vector<1x8x512xf32>
    %56 = vector.shape_cast %55 : vector<1x8x512xf32> to vector<8x512xf32>
    %cst_22 = arith.constant dense<0.000000e+00> : vector<8x512xf32>
    %57 = tpu.matmul %49, %5, %cst_22 {dimension_numbers = #tpu.dot_dimension_numbers<[1], [0], [0], [1], [0, 0, 1, 1], [], []>} : vector<8x128xf32>, vector<128x512xf32>, vector<8x512xf32> -> vector<8x512xf32>
    %58 = arith.addf %56, %57 : vector<8x512xf32>
    %59 = vector.extract_strided_slice %58 {offsets = [0, 0], sizes = [8, 128], strides = [1, 1]} : vector<8x512xf32> to vector<8x128xf32>
    %cst_23 = arith.constant 5.000000e-01 : f32
    %60 = vector.broadcast %cst_23 : f32 to vector<8x128xf32>
    %61 = arith.mulf %60, %59 : vector<8x128xf32>
    %62 = math.tanh %61 : vector<8x128xf32>
    %cst_24 = arith.constant 5.000000e-01 : f32
    %63 = vector.broadcast %cst_24 : f32 to vector<8x128xf32>
    %64 = arith.mulf %63, %62 : vector<8x128xf32>
    %cst_25 = arith.constant 5.000000e-01 : f32
    %65 = vector.broadcast %cst_25 : f32 to vector<8x128xf32>
    %66 = arith.addf %64, %65 : vector<8x128xf32>
    %67 = vector.extract_strided_slice %58 {offsets = [0, 128], sizes = [8, 128], strides = [1, 1]} : vector<8x512xf32> to vector<8x128xf32>
    %cst_26 = arith.constant 5.000000e-01 : f32
    %68 = vector.broadcast %cst_26 : f32 to vector<8x128xf32>
    %69 = arith.mulf %68, %67 : vector<8x128xf32>
    %70 = math.tanh %69 : vector<8x128xf32>
    %cst_27 = arith.constant 5.000000e-01 : f32
    %71 = vector.broadcast %cst_27 : f32 to vector<8x128xf32>
    %72 = arith.mulf %71, %70 : vector<8x128xf32>
    %cst_28 = arith.constant 5.000000e-01 : f32
    %73 = vector.broadcast %cst_28 : f32 to vector<8x128xf32>
    %74 = arith.addf %72, %73 : vector<8x128xf32>
    %75 = vector.extract_strided_slice %58 {offsets = [0, 256], sizes = [8, 128], strides = [1, 1]} : vector<8x512xf32> to vector<8x128xf32>
    %76 = math.tanh %75 : vector<8x128xf32>
    %77 = vector.extract_strided_slice %58 {offsets = [0, 384], sizes = [8, 128], strides = [1, 1]} : vector<8x512xf32> to vector<8x128xf32>
    %cst_29 = arith.constant 5.000000e-01 : f32
    %78 = vector.broadcast %cst_29 : f32 to vector<8x128xf32>
    %79 = arith.mulf %78, %77 : vector<8x128xf32>
    %80 = math.tanh %79 : vector<8x128xf32>
    %cst_30 = arith.constant 5.000000e-01 : f32
    %81 = vector.broadcast %cst_30 : f32 to vector<8x128xf32>
    %82 = arith.mulf %81, %80 : vector<8x128xf32>
    %cst_31 = arith.constant 5.000000e-01 : f32
    %83 = vector.broadcast %cst_31 : f32 to vector<8x128xf32>
    %84 = arith.addf %82, %83 : vector<8x128xf32>
    %85 = arith.mulf %74, %52 : vector<8x128xf32>
    %86 = arith.mulf %66, %76 : vector<8x128xf32>
    %87 = arith.addf %85, %86 : vector<8x128xf32>
    %88 = math.tanh %87 : vector<8x128xf32>
    %89 = arith.mulf %84, %88 : vector<8x128xf32>
    %90 = vector.broadcast %53 : i32 to vector<8x1xi32>
    %91 = arith.cmpi slt, %90, %4 : vector<8x1xi32>
    %92 = vector.shape_cast %91 : vector<8x1xi1> to vector<8x1xi1>
    %93 = vector.broadcast %92 : vector<8x1xi1> to vector<8x128xi1>
    %94 = arith.select %93, %89, %49 : vector<8x128xi1>, vector<8x128xf32>
    %95 = vector.shape_cast %91 : vector<8x1xi1> to vector<8x1xi1>
    %96 = vector.broadcast %95 : vector<8x1xi1> to vector<8x128xi1>
    %97 = arith.select %96, %87, %52 : vector<8x128xi1>, vector<8x128xf32>
    %c2_i32 = arith.constant 2 : i32
    %98 = arith.addi %3, %c2_i32 : i32
    %99 = arith.index_cast %c2_i32 : i32 to index
    %c0_32 = arith.constant 0 : index
    %c0_33 = arith.constant 0 : index
    %100 = vector.load %arg3[%99, %c0_32, %c0_33] : memref<4x8x512xf32, #tpu.memory_space<vmem>>, vector<1x8x512xf32>
    %101 = vector.shape_cast %100 : vector<1x8x512xf32> to vector<8x512xf32>
    %cst_34 = arith.constant dense<0.000000e+00> : vector<8x512xf32>
    %102 = tpu.matmul %94, %5, %cst_34 {dimension_numbers = #tpu.dot_dimension_numbers<[1], [0], [0], [1], [0, 0, 1, 1], [], []>} : vector<8x128xf32>, vector<128x512xf32>, vector<8x512xf32> -> vector<8x512xf32>
    %103 = arith.addf %101, %102 : vector<8x512xf32>
    %104 = vector.extract_strided_slice %103 {offsets = [0, 0], sizes = [8, 128], strides = [1, 1]} : vector<8x512xf32> to vector<8x128xf32>
    %cst_35 = arith.constant 5.000000e-01 : f32
    %105 = vector.broadcast %cst_35 : f32 to vector<8x128xf32>
    %106 = arith.mulf %105, %104 : vector<8x128xf32>
    %107 = math.tanh %106 : vector<8x128xf32>
    %cst_36 = arith.constant 5.000000e-01 : f32
    %108 = vector.broadcast %cst_36 : f32 to vector<8x128xf32>
    %109 = arith.mulf %108, %107 : vector<8x128xf32>
    %cst_37 = arith.constant 5.000000e-01 : f32
    %110 = vector.broadcast %cst_37 : f32 to vector<8x128xf32>
    %111 = arith.addf %109, %110 : vector<8x128xf32>
    %112 = vector.extract_strided_slice %103 {offsets = [0, 128], sizes = [8, 128], strides = [1, 1]} : vector<8x512xf32> to vector<8x128xf32>
    %cst_38 = arith.constant 5.000000e-01 : f32
    %113 = vector.broadcast %cst_38 : f32 to vector<8x128xf32>
    %114 = arith.mulf %113, %112 : vector<8x128xf32>
    %115 = math.tanh %114 : vector<8x128xf32>
    %cst_39 = arith.constant 5.000000e-01 : f32
    %116 = vector.broadcast %cst_39 : f32 to vector<8x128xf32>
    %117 = arith.mulf %116, %115 : vector<8x128xf32>
    %cst_40 = arith.constant 5.000000e-01 : f32
    %118 = vector.broadcast %cst_40 : f32 to vector<8x128xf32>
    %119 = arith.addf %117, %118 : vector<8x128xf32>
    %120 = vector.extract_strided_slice %103 {offsets = [0, 256], sizes = [8, 128], strides = [1, 1]} : vector<8x512xf32> to vector<8x128xf32>
    %121 = math.tanh %120 : vector<8x128xf32>
    %122 = vector.extract_strided_slice %103 {offsets = [0, 384], sizes = [8, 128], strides = [1, 1]} : vector<8x512xf32> to vector<8x128xf32>
    %cst_41 = arith.constant 5.000000e-01 : f32
    %123 = vector.broadcast %cst_41 : f32 to vector<8x128xf32>
    %124 = arith.mulf %123, %122 : vector<8x128xf32>
    %125 = math.tanh %124 : vector<8x128xf32>
    %cst_42 = arith.constant 5.000000e-01 : f32
    %126 = vector.broadcast %cst_42 : f32 to vector<8x128xf32>
    %127 = arith.mulf %126, %125 : vector<8x128xf32>
    %cst_43 = arith.constant 5.000000e-01 : f32
    %128 = vector.broadcast %cst_43 : f32 to vector<8x128xf32>
    %129 = arith.addf %127, %128 : vector<8x128xf32>
    %130 = arith.mulf %119, %97 : vector<8x128xf32>
    %131 = arith.mulf %111, %121 : vector<8x128xf32>
    %132 = arith.addf %130, %131 : vector<8x128xf32>
    %133 = math.tanh %132 : vector<8x128xf32>
    %134 = arith.mulf %129, %133 : vector<8x128xf32>
    %135 = vector.broadcast %98 : i32 to vector<8x1xi32>
    %136 = arith.cmpi slt, %135, %4 : vector<8x1xi32>
    %137 = vector.shape_cast %136 : vector<8x1xi1> to vector<8x1xi1>
    %138 = vector.broadcast %137 : vector<8x1xi1> to vector<8x128xi1>
    %139 = arith.select %138, %134, %94 : vector<8x128xi1>, vector<8x128xf32>
    %140 = vector.shape_cast %136 : vector<8x1xi1> to vector<8x1xi1>
    %141 = vector.broadcast %140 : vector<8x1xi1> to vector<8x128xi1>
    %142 = arith.select %141, %132, %97 : vector<8x128xi1>, vector<8x128xf32>
    %c3_i32 = arith.constant 3 : i32
    %143 = arith.addi %3, %c3_i32 : i32
    %144 = arith.index_cast %c3_i32 : i32 to index
    %c0_44 = arith.constant 0 : index
    %c0_45 = arith.constant 0 : index
    %145 = vector.load %arg3[%144, %c0_44, %c0_45] : memref<4x8x512xf32, #tpu.memory_space<vmem>>, vector<1x8x512xf32>
    %146 = vector.shape_cast %145 : vector<1x8x512xf32> to vector<8x512xf32>
    %cst_46 = arith.constant dense<0.000000e+00> : vector<8x512xf32>
    %147 = tpu.matmul %139, %5, %cst_46 {dimension_numbers = #tpu.dot_dimension_numbers<[1], [0], [0], [1], [0, 0, 1, 1], [], []>} : vector<8x128xf32>, vector<128x512xf32>, vector<8x512xf32> -> vector<8x512xf32>
    %148 = arith.addf %146, %147 : vector<8x512xf32>
    %149 = vector.extract_strided_slice %148 {offsets = [0, 0], sizes = [8, 128], strides = [1, 1]} : vector<8x512xf32> to vector<8x128xf32>
    %cst_47 = arith.constant 5.000000e-01 : f32
    %150 = vector.broadcast %cst_47 : f32 to vector<8x128xf32>
    %151 = arith.mulf %150, %149 : vector<8x128xf32>
    %152 = math.tanh %151 : vector<8x128xf32>
    %cst_48 = arith.constant 5.000000e-01 : f32
    %153 = vector.broadcast %cst_48 : f32 to vector<8x128xf32>
    %154 = arith.mulf %153, %152 : vector<8x128xf32>
    %cst_49 = arith.constant 5.000000e-01 : f32
    %155 = vector.broadcast %cst_49 : f32 to vector<8x128xf32>
    %156 = arith.addf %154, %155 : vector<8x128xf32>
    %157 = vector.extract_strided_slice %148 {offsets = [0, 128], sizes = [8, 128], strides = [1, 1]} : vector<8x512xf32> to vector<8x128xf32>
    %cst_50 = arith.constant 5.000000e-01 : f32
    %158 = vector.broadcast %cst_50 : f32 to vector<8x128xf32>
    %159 = arith.mulf %158, %157 : vector<8x128xf32>
    %160 = math.tanh %159 : vector<8x128xf32>
    %cst_51 = arith.constant 5.000000e-01 : f32
    %161 = vector.broadcast %cst_51 : f32 to vector<8x128xf32>
    %162 = arith.mulf %161, %160 : vector<8x128xf32>
    %cst_52 = arith.constant 5.000000e-01 : f32
    %163 = vector.broadcast %cst_52 : f32 to vector<8x128xf32>
    %164 = arith.addf %162, %163 : vector<8x128xf32>
    %165 = vector.extract_strided_slice %148 {offsets = [0, 256], sizes = [8, 128], strides = [1, 1]} : vector<8x512xf32> to vector<8x128xf32>
    %166 = math.tanh %165 : vector<8x128xf32>
    %167 = vector.extract_strided_slice %148 {offsets = [0, 384], sizes = [8, 128], strides = [1, 1]} : vector<8x512xf32> to vector<8x128xf32>
    %cst_53 = arith.constant 5.000000e-01 : f32
    %168 = vector.broadcast %cst_53 : f32 to vector<8x128xf32>
    %169 = arith.mulf %168, %167 : vector<8x128xf32>
    %170 = math.tanh %169 : vector<8x128xf32>
    %cst_54 = arith.constant 5.000000e-01 : f32
    %171 = vector.broadcast %cst_54 : f32 to vector<8x128xf32>
    %172 = arith.mulf %171, %170 : vector<8x128xf32>
    %cst_55 = arith.constant 5.000000e-01 : f32
    %173 = vector.broadcast %cst_55 : f32 to vector<8x128xf32>
    %174 = arith.addf %172, %173 : vector<8x128xf32>
    %175 = arith.mulf %164, %142 : vector<8x128xf32>
    %176 = arith.mulf %156, %166 : vector<8x128xf32>
    %177 = arith.addf %175, %176 : vector<8x128xf32>
    %178 = math.tanh %177 : vector<8x128xf32>
    %179 = arith.mulf %174, %178 : vector<8x128xf32>
    %180 = vector.broadcast %143 : i32 to vector<8x1xi32>
    %181 = arith.cmpi slt, %180, %4 : vector<8x1xi32>
    %182 = vector.shape_cast %181 : vector<8x1xi1> to vector<8x1xi1>
    %183 = vector.broadcast %182 : vector<8x1xi1> to vector<8x128xi1>
    %184 = arith.select %183, %179, %139 : vector<8x128xi1>, vector<8x128xf32>
    %185 = vector.shape_cast %181 : vector<8x1xi1> to vector<8x1xi1>
    %186 = vector.broadcast %185 : vector<8x1xi1> to vector<8x128xi1>
    %187 = arith.select %186, %177, %142 : vector<8x128xi1>, vector<8x128xf32>
    %c4_i32_56 = arith.constant 4 : i32
    %c0_57 = arith.constant 0 : index
    %c0_58 = arith.constant 0 : index
    %188 = vector.load %arg5[%c0_57, %c0_58] : memref<8x128xf32, #tpu.memory_space<vmem>>, vector<8x128xf32>
    tpu.vector_store %arg5[%c0_57, %c0_58], %184 {strides = array<i32>} : memref<8x128xf32, #tpu.memory_space<vmem>>, vector<8x128xf32>,
    %c0_59 = arith.constant 0 : index
    %c0_60 = arith.constant 0 : index
    %189 = vector.load %arg6[%c0_59, %c0_60] : memref<8x128xf32, #tpu.memory_space<vmem>>, vector<8x128xf32>
    tpu.vector_store %arg6[%c0_59, %c0_60], %187 {strides = array<i32>} : memref<8x128xf32, #tpu.memory_space<vmem>>, vector<8x128xf32>,
    return
  }
  func.func @transform_0(%arg0: i32, %arg1: i32) -> (i32, i32) {
    %c0_i32 = arith.constant 0 : i32
    %c0_i32_0 = arith.constant 0 : i32
    return %arg0, %c0_i32 : i32, i32
  }
  func.func @transform_1(%arg0: i32, %arg1: i32) -> (i32, i32, i32) {
    %c0_i32 = arith.constant 0 : i32
    %c0_i32_0 = arith.constant 0 : i32
    return %arg1, %arg0, %c0_i32 : i32, i32, i32
  }
  func.func @transform_2(%arg0: i32, %arg1: i32) -> (i32, i32) {
    %c0_i32 = arith.constant 0 : i32
    %c0_i32_0 = arith.constant 0 : i32
    %c0_i32_1 = arith.constant 0 : i32
    return %c0_i32, %c0_i32_0 : i32, i32
  }
  func.func @transform_3(%arg0: i32, %arg1: i32) -> (i32, i32) {
    %c0_i32 = arith.constant 0 : i32
    %c0_i32_0 = arith.constant 0 : i32
    return %arg0, %c0_i32 : i32, i32
  }
  func.func @transform_4(%arg0: i32, %arg1: i32) -> (i32, i32) {
    %c0_i32 = arith.constant 0 : i32
    %c0_i32_0 = arith.constant 0 : i32
    return %arg0, %c0_i32 : i32, i32
  }
}

</mosaic_0001>

<llo_original>
// kernel: encoder_forward.1
$region0: #{encoder_forward.1}
  #allocation0 [shape = 'u32[]', space=smem, size = 0x4, offset = 0x4, fixed_abs, tag = 'smem constant byte address 0x4 - core index']
  #allocation1 [shape = 'u32[144,128]{1,0:T(1,128)}', space=vmem, size = 0x12000, scoped, tag = 'internal scratch']
  %s0 = inlined_call_operand.vmem [shape: s32[8,1], index: 0, kind: input, shape index: {}]
  %s1 = inlined_call_operand.vmem [shape: f32[8,8,512], index: 1, kind: input, shape index: {}]
  %s2 = inlined_call_operand.vmem [shape: f32[128,512], index: 2, kind: input, shape index: {}]
  %s3 = inlined_call_operand.vmem [shape: f32[8,128], index: 3, kind: output, shape index: {0}]
  %s4 = inlined_call_operand.vmem [shape: f32[8,128], index: 4, kind: output, shape index: {1}]
  %5 = xla_tuple %s3, %s4
  %s6 = sld [smem:[#allocation0]]
  $region57: #{encoder_forward.1} parent=0
    _
  %s8 = ssub.s32 1, %s6
  %s9 = scalar_select 0, %s8, %s6
  loop: start=0, step=1, limit=4
  $region2: #{encoder_forward.1} parent=0 // loop_pre_header
    _
  $region3: #{encoder_forward.1} parent=0 // loop_header
    %s11 = sphi 0, %s15
    %p12 = scmp.ge.s32.totalorder %s11, 4
    %s18 = sphi 0, %s30
    %s19 = sphi 0, %s26
    %s20 = sphi 0, %s18
    %s21 = sphi 0, %s19
    %s22 = sphi 0, %s20
    %s23 = sphi 0, %s21
    %s33 = sphi 0, %s35
    %s36 = sphi 0, %s33
    %s37 = sphi 0, %s36
    %s53 = sphi 0, %s37
    %s61 = sphi 0, %s63
    %s64 = sphi 0, %s61
    %s65 = sphi 0, %s64
    %s81 = sphi 0, %s65
    %s85 = sphi 0, %s85
    %s87 = sphi 0, %s85
    %s88 = sphi 0, %s87
    %s102 = sphi 0, %s88
    %s108 = sphi 0, %s110
    %s111 = sphi 0, %s108
    %s112 = sphi 0, %s111
    %s128 = sphi 0, %s112
    %s134 = sphi 0, %s136
    %s137 = sphi 0, %s134
    %s138 = sphi 0, %s137
    %s154 = sphi 0, %s138
  $region4: #{encoder_forward.1} parent=0 // loop_header_branch
    %14 = sbr.rel (%p12) target = $region8
  $region5: #{encoder_forward.1} parent=0 // loop_body
    %s16 = ssub.s32 %s11, 1
    %s17 = ssub.s32 %s11, 2
    %s24 = sadd.s32 1, %s19
    %p25 = scmp.ge.s32.totalorder %s24, 2
    %s26 = scalar_select %p25, 0, %s24
    %s27 = sadd.s32 1, %s18
    %s28 = scalar_select %p25, %s27, %s18
    %p29 = scmp.ge.s32.totalorder %s28, 1
    %s30 = scalar_select %p29, 0, %s28
    %s31 = ssub.s32 %s18, %s30
    %p32 = scmp.eq.s32.totalorder %s31, 0
    %s34 = sadd.s32 %s33, 1
    %s35 = scalar_select %p32, %s33, %s34
    %p38 = pneg %p32
    %p39 = scmp.eq.s32.totalorder %s11, 1
    %p40 = por %p38, %p39
    %p41 = scmp.ne.s32.totalorder %s33, %s36
    %p42 = scmp.eq.s32.totalorder %s11, 0
    %p43 = por %p41, %p42
    %p44 = scmp.ne.s32.totalorder %s33, %s36
    %p45 = scmp.eq.s32.totalorder %s16, 1
    %p46 = por %p44, %p45
    %p47 = scmp.ne.s32.totalorder %s36, %s37
    %p48 = scmp.eq.s32.totalorder %s16, 0
    %p49 = por %p47, %p48
    %p50 = scmp.ne.s32.totalorder %s36, %s37
    %p51 = scmp.eq.s32.totalorder %s17, 1
    %p52 = por %p50, %p51
    %p54 = scmp.ne.s32.totalorder %s37, %s53
    %p55 = scmp.eq.s32.totalorder %s17, 0
    %p56 = por %p54, %p55
    %s57 = ssub.s32 %s19, %s26
    %s58 = ssub.s32 %s18, %s30
    %s59 = sor.u32 %s57, %s58
    %p60 = scmp.eq.s32.totalorder %s59, 0
    %s62 = sadd.s32 %s61, 1
    %s63 = scalar_select %p60, %s61, %s62
    %p66 = pneg %p60
    %p67 = scmp.eq.s32.totalorder %s11, 1
    %p68 = por %p66, %p67
    %p69 = scmp.ne.s32.totalorder %s61, %s64
    %p70 = scmp.eq.s32.totalorder %s11, 0
    %p71 = por %p69, %p70
    %p72 = scmp.ne.s32.totalorder %s61, %s64
    %p73 = scmp.eq.s32.totalorder %s16, 1
    %p74 = por %p72, %p73
    %p75 = scmp.ne.s32.totalorder %s64, %s65
    %p76 = scmp.eq.s32.totalorder %s16, 0
    %p77 = por %p75, %p76
    %p78 = scmp.ne.s32.totalorder %s64, %s65
    %p79 = scmp.eq.s32.totalorder %s17, 1
    %p80 = por %p78, %p79
    %p82 = scmp.ne.s32.totalorder %s65, %s81
    %p83 = scmp.eq.s32.totalorder %s17, 0
    %p84 = por %p82, %p83
    %s86 = sadd.s32 %s85, 1
    %p89 = scmp.eq.s32.totalorder %s11, 1
    %p90 = scmp.ne.s32.totalorder %s85, %s87
    %p91 = scmp.eq.s32.totalorder %s11, 0
    %p92 = por %p90, %p91
    %p93 = scmp.ne.s32.totalorder %s85, %s87
    %p94 = scmp.eq.s32.totalorder %s16, 1
    %p95 = por %p93, %p94
    %p96 = scmp.ne.s32.totalorder %s87, %s88
    %p97 = scmp.eq.s32.totalorder %s16, 0
    %p98 = por %p96, %p97
    %p99 = scmp.ne.s32.totalorder %s87, %s88
    %p100 = scmp.eq.s32.totalorder %s17, 1
    %p101 = por %p99, %p100
    %p103 = scmp.ne.s32.totalorder %s88, %s102
    %p104 = scmp.eq.s32.totalorder %s17, 0
    %p105 = por %p103, %p104
    %s106 = ssub.s32 %s18, %s30
    %p107 = scmp.eq.s32.totalorder %s106, 0
    %s109 = sadd.s32 %s108, 1
    %s110 = scalar_select %p107, %s108, %s109
    %p113 = pneg %p107
    %p114 = scmp.eq.s32.totalorder %s11, 1
    %p115 = por %p113, %p114
    %p116 = scmp.ne.s32.totalorder %s108, %s111
    %p117 = scmp.eq.s32.totalorder %s11, 0
    %p118 = por %p116, %p117
    %p119 = scmp.ne.s32.totalorder %s108, %s111
    %p120 = scmp.eq.s32.totalorder %s16, 1
    %p121 = por %p119, %p120
    %p122 = scmp.ne.s32.totalorder %s111, %s112
    %p123 = scmp.eq.s32.totalorder %s16, 0
    %p124 = por %p122, %p123
    %p125 = scmp.ne.s32.totalorder %s111, %s112
    %p126 = scmp.eq.s32.totalorder %s17, 1
    %p127 = por %p125, %p126
    %p129 = scmp.ne.s32.totalorder %s112, %s128
    %p130 = scmp.eq.s32.totalorder %s17, 0
    %p131 = por %p129, %p130
    %s132 = ssub.s32 %s18, %s30
    %p133 = scmp.eq.s32.totalorder %s132, 0
    %s135 = sadd.s32 %s134, 1
    %s136 = scalar_select %p133, %s134, %s135
    %p139 = pneg %p133
    %p140 = scmp.eq.s32.totalorder %s11, 1
    %p141 = por %p139, %p140
    %p142 = scmp.ne.s32.totalorder %s134, %s137
    %p143 = scmp.eq.s32.totalorder %s11, 0
    %p144 = por %p142, %p143
    %p145 = scmp.ne.s32.totalorder %s134, %s137
    %p146 = scmp.eq.s32.totalorder %s16, 1
    %p147 = por %p145, %p146
    %p148 = scmp.ne.s32.totalorder %s137, %s138
    %p149 = scmp.eq.s32.totalorder %s16, 0
    %p150 = por %p148, %p149
    %p151 = scmp.ne.s32.totalorder %s137, %s138
    %p152 = scmp.eq.s32.totalorder %s17, 1
    %p153 = por %p151, %p152
    %p155 = scmp.ne.s32.totalorder %s138, %s154
    %p156 = scmp.eq.s32.totalorder %s17, 0
    %p157 = por %p155, %p156
    %p158 = scmp.le.s32.totalorder 1, %s11
    %p159 = scmp.lt.s32.totalorder %s11, 3
    %p160 = pnand %p158, %p159
    %p161 = pneg %p160
    // Predicated region
    $region9: #{encoder_forward.1} parent=5 // pred_check
      _
    $region10: #{encoder_forward.1} parent=5 // pred_check_branch
      %163 = sbr.rel (%p160) target = $region12
    $region11: #{encoder_forward.1} parent=5 // pred_region
      %s164 = ssub.s32 %s11, 1
      // Predicated region
      $region13: #{encoder_forward.1} parent=11 // pred_check
        %p165 = pneg %p49
      $region14: #{encoder_forward.1} parent=11 // pred_check_branch
        %167 = sbr.rel (%p165) target = $region16
      $region15: #{encoder_forward.1} parent=11 // pred_region
        %p168 = scmp.lt.s32.totalorder %s20, 0
        %s169 = scalar_select %p168, %s20, 0
        %s170 = smul.addr %s169, 8
        %s171 = scalar_lea.vmem %s0, %s170
      $region16: #{encoder_forward.1} parent=11 // pred_fallthru
        _
      // Predicated region
      $region17: #{encoder_forward.1} parent=11 // pred_check
        %p172 = pneg %p98
      $region18: #{encoder_forward.1} parent=11 // pred_check_branch
        %174 = sbr.rel (%p172) target = $region20
      $region19: #{encoder_forward.1} parent=11 // pred_region
        _
      $region20: #{encoder_forward.1} parent=11 // pred_fallthru
        _
    $region12: #{encoder_forward.1} parent=5 // pred_fallthru
      _
    %p175 = scmp.lt.s32.totalorder %s11, 2
    // Predicated region
    $region21: #{encoder_forward.1} parent=5 // pred_check
      %p176 = pneg %p175
    $region22: #{encoder_forward.1} parent=5 // pred_check_branch
      %178 = sbr.rel (%p176) target = $region24
    $region23: #{encoder_forward.1} parent=5 // pred_region
      // Predicated region
      $region25: #{encoder_forward.1} parent=23 // pred_check
        %p179 = pneg %p71
      $region26: #{encoder_forward.1} parent=23 // pred_check_branch
        %181 = sbr.rel (%p179) target = $region28
      $region27: #{encoder_forward.1} parent=23 // pred_region
        %s182 = smul.u32 4, %s19
        %p183 = scmp.lt.s32.totalorder %s182, 7
        %s184 = scalar_select %p183, %s182, 7
        %p185 = scmp.lt.s32.totalorder %s18, 0
        %s186 = scalar_select %p185, %s18, 0
        %s187 = smul.addr %s186, 4
        %s188 = smul.addr %s184, 4
        %s189 = sadd.s32 %s187, %s188
        %s190 = smul.addr %s189, 8
        %s191 = scalar_lea.vmem %s1, %s190
        %s192 = smul.u32 4, %s19
      $region28: #{encoder_forward.1} parent=23 // pred_fallthru
        _
    $region24: #{encoder_forward.1} parent=5 // pred_fallthru
      _
    %p193 = scmp.le.s32.totalorder 1, %s11
    %p194 = scmp.lt.s32.totalorder %s11, 3
    %p195 = pnand %p193, %p194
    %p196 = pneg %p195
    // Predicated region
    $region29: #{encoder_forward.1} parent=5 // pred_check
      _
    $region30: #{encoder_forward.1} parent=5 // pred_check_branch
      %198 = sbr.rel (%p195) target = $region32
    $region31: #{encoder_forward.1} parent=5 // pred_region
      %s199 = ssub.s32 %s11, 1
      %p200 = scmp.lt.s32.totalorder %s20, 0
      %s201 = scalar_select %p200, %s20, 0
      %s202 = smul.addr %s201, 8
      %s203 = scalar_lea.vmem %s0, %s202
      %p204 = pneg %p49
      %p205 = pneg %p46
      %s206 = smul.u32 4, %s21
      %p207 = scmp.lt.s32.totalorder %s206, 7
      %s208 = scalar_select %p207, %s206, 7
      %p209 = scmp.lt.s32.totalorder %s20, 0
      %s210 = scalar_select %p209, %s20, 0
      %s211 = smul.addr %s210, 4
      %s212 = smul.addr %s208, 4
      %s213 = sadd.s32 %s211, %s212
      %s214 = smul.addr %s213, 8
      %s215 = scalar_lea.vmem %s1, %s214
      %p216 = pneg %p77
      %p217 = pneg %p74
      %p218 = pneg %p98
      %p219 = pneg %p95
      %p220 = pneg %p124
      %p221 = pneg %p121
      %p222 = scmp.lt.s32.totalorder %s20, 0
      %s223 = scalar_select %p222, %s20, 0
      %s224 = smul.addr %s223, 8
      %s225 = scalar_lea.vmem %s3, %s224
      %p226 = pneg %p150
      %p227 = pneg %p147
      %p228 = scmp.lt.s32.totalorder %s20, 0
      %s229 = scalar_select %p228, %s20, 0
      %s230 = smul.addr %s229, 8
      %s231 = scalar_lea.vmem %s4, %s230
      %p232 = scmp.lt.s32.totalorder %s20, 0
      %s233 = scalar_select %p232, %s20, 0
      %s234 = smul.addr %s233, 8
      %s235 = scalar_lea.vmem %s0, %s234
      %s236 = smul.u32 4, %s21
      %p237 = scmp.lt.s32.totalorder %s236, 7
      %s238 = scalar_select %p237, %s236, 7
      %p239 = scmp.lt.s32.totalorder %s20, 0
      %s240 = scalar_select %p239, %s20, 0
      %s241 = smul.addr %s240, 4
      %s242 = smul.addr %s238, 4
      %s243 = sadd.s32 %s241, %s242
      %s244 = smul.addr %s243, 8
      %s245 = scalar_lea.vmem %s1, %s244
      %s246 = smul.u32 4, %s21
      %p247 = scmp.lt.s32.totalorder %s20, 0
      %s248 = scalar_select %p247, %s20, 0
      %s249 = smul.addr %s248, 8
      %s250 = scalar_lea.vmem %s3, %s249
      %p251 = scmp.lt.s32.totalorder %s20, 0
      %s252 = scalar_select %p251, %s20, 0
      %s253 = smul.addr %s252, 8
      %s254 = scalar_lea.vmem %s4, %s253
      %p255 = scmp.eq.s32.totalorder %s21, 0
      // Predicated region
      $region33: #{encoder_forward.1} parent=31 // pred_check
        %p256 = pneg %p255
      $region34: #{encoder_forward.1} parent=31 // pred_check_branch
        %258 = sbr.rel (%p256) target = $region36
      $region35: #{encoder_forward.1} parent=31 // pred_region
        %259 = vst [vmem:[%s250] sm:$0xff] 0.0
        %260 = vst [vmem:[%s254] sm:$0xff] 0.0
      $region36: #{encoder_forward.1} parent=31 // pred_fallthru
        _
      %s261 = smul.u32 %s21, 4
      %v262 = vld [vmem:[%s235] sm:$0xff]
      %v263 = vld [vmem:[%s2] sm:$0xff]
      %v264 = vld [vmem:[%s2 + $0x8] sm:$0xff]
      %v265 = vld [vmem:[%s2 + $0x10] sm:$0xff]
      %v266 = vld [vmem:[%s2 + $0x18] sm:$0xff]
      %v267 = vld [vmem:[%s2 + $0x20] sm:$0xff]
      %v268 = vld [vmem:[%s2 + $0x28] sm:$0xff]
      %v269 = vld [vmem:[%s2 + $0x30] sm:$0xff]
      %v270 = vld [vmem:[%s2 + $0x38] sm:$0xff]
      %v271 = vld [vmem:[%s2 + $0x40] sm:$0xff]
      %v272 = vld [vmem:[%s2 + $0x48] sm:$0xff]
      %v273 = vld [vmem:[%s2 + $0x50] sm:$0xff]
      %v274 = vld [vmem:[%s2 + $0x58] sm:$0xff]
      %v275 = vld [vmem:[%s2 + $0x60] sm:$0xff]
      %v276 = vld [vmem:[%s2 + $0x68] sm:$0xff]
      %v277 = vld [vmem:[%s2 + $0x70] sm:$0xff]
      %v278 = vld [vmem:[%s2 + $0x78] sm:$0xff]
      %v279 = vld [vmem:[%s2 + $0x80] sm:$0xff]
      %v280 = vld [vmem:[%s2 + $0x88] sm:$0xff]
      %v281 = vld [vmem:[%s2 + $0x90] sm:$0xff]
      %v282 = vld [vmem:[%s2 + $0x98] sm:$0xff]
      %v283 = vld [vmem:[%s2 + $0xa0] sm:$0xff]
      %v284 = vld [vmem:[%s2 + $0xa8] sm:$0xff]
      %v285 = vld [vmem:[%s2 + $0xb0] sm:$0xff]
      %v286 = vld [vmem:[%s2 + $0xb8] sm:$0xff]
      %v287 = vld [vmem:[%s2 + $0xc0] sm:$0xff]
      %v288 = vld [vmem:[%s2 + $0xc8] sm:$0xff]
      %v289 = vld [vmem:[%s2 + $0xd0] sm:$0xff]
      %v290 = vld [vmem:[%s2 + $0xd8] sm:$0xff]
      %v291 = vld [vmem:[%s2 + $0xe0] sm:$0xff]
      %v292 = vld [vmem:[%s2 + $0xe8] sm:$0xff]
      %v293 = vld [vmem:[%s2 + $0xf0] sm:$0xff]
      %v294 = vld [vmem:[%s2 + $0xf8] sm:$0xff]
      %v295 = vld [vmem:[%s2 + $0x100] sm:$0xff]
      %v296 = vld [vmem:[%s2 + $0x108] sm:$0xff]
      %v297 = vld [vmem:[%s2 + $0x110] sm:$0xff]
      %v298 = vld [vmem:[%s2 + $0x118] sm:$0xff]
      %v299 = vld [vmem:[%s2 + $0x120] sm:$0xff]
      %v300 = vld [vmem:[%s2 + $0x128] sm:$0xff]
      %v301 = vld [vmem:[%s2 + $0x130] sm:$0xff]
      %v302 = vld [vmem:[%s2 + $0x138] sm:$0xff]
      %v303 = vld [vmem:[%s2 + $0x140] sm:$0xff]
      %v304 = vld [vmem:[%s2 + $0x148] sm:$0xff]
      %v305 = vld [vmem:[%s2 + $0x150] sm:$0xff]
      %v306 = vld [vmem:[%s2 + $0x158] sm:$0xff]
      %v307 = vld [vmem:[%s2 + $0x160] sm:$0xff]
      %v308 = vld [vmem:[%s2 + $0x168] sm:$0xff]
      %v309 = vld [vmem:[%s2 + $0x170] sm:$0xff]
      %v310 = vld [vmem:[%s2 + $0x178] sm:$0xff]
      %v311 = vld [vmem:[%s2 + $0x180] sm:$0xff]
      %v312 = vld [vmem:[%s2 + $0x188] sm:$0xff]
      %v313 = vld [vmem:[%s2 + $0x190] sm:$0xff]
      %v314 = vld [vmem:[%s2 + $0x198] sm:$0xff]
      %v315 = vld [vmem:[%s2 + $0x1a0] sm:$0xff]
      %v316 = vld [vmem:[%s2 + $0x1a8] sm:$0xff]
      %v317 = vld [vmem:[%s2 + $0x1b0] sm:$0xff]
      %v318 = vld [vmem:[%s2 + $0x1b8] sm:$0xff]
      %v319 = vld [vmem:[%s2 + $0x1c0] sm:$0xff]
      %v320 = vld [vmem:[%s2 + $0x1c8] sm:$0xff]
      %v321 = vld [vmem:[%s2 + $0x1d0] sm:$0xff]
      %v322 = vld [vmem:[%s2 + $0x1d8] sm:$0xff]
      %v323 = vld [vmem:[%s2 + $0x1e0] sm:$0xff]
      %v324 = vld [vmem:[%s2 + $0x1e8] sm:$0xff]
      %v325 = vld [vmem:[%s2 + $0x1f0] sm:$0xff]
      %v326 = vld [vmem:[%s2 + $0x1f8] sm:$0xff]
      %v327 = vld [vmem:[%s250] sm:$0xff]
      %v328 = vld [vmem:[%s254] sm:$0xff]
      %v329 = vld [vmem:[%s245] sm:$0xff]
      %v330 = vld [vmem:[%s245 + $0x8] sm:$0xff]
      %v331 = vld [vmem:[%s245 + $0x10] sm:$0xff]
      %v332 = vld [vmem:[%s245 + $0x18] sm:$0xff]
      %333 = vmatprep.subr.mxu0 %v264
      %334 = vmatpush1.msra.mxu0 %v263
      %335 = vmatprep.subr.mxu0 %v268
      %336 = vmatpush1.msra.mxu0 %v267
      %337 = vmatprep.subr.mxu0 %v272
      %338 = vmatpush1.msra.mxu0 %v271
      %339 = vmatprep.subr.mxu0 %v276
      %340 = vmatpush1.msra.mxu0 %v275
      %341 = vmatprep.subr.mxu0 %v280
      %342 = vmatpush1.msra.mxu0 %v279
      %343 = vmatprep.subr.mxu0 %v284
      %344 = vmatpush1.msra.mxu0 %v283
      %345 = vmatprep.subr.mxu0 %v288
      %346 = vmatpush1.msra.mxu0 %v287
      %347 = vmatprep.subr.mxu0 %v292
      %348 = vmatpush1.msra.mxu0 %v291
      %349 = vmatprep.subr.mxu0 %v296
      %350 = vmatpush1.msra.mxu0 %v295
      %351 = vmatprep.subr.mxu0 %v300
      %352 = vmatpush1.msra.mxu0 %v299
      %353 = vmatprep.subr.mxu0 %v304
      %354 = vmatpush1.msra.mxu0 %v303
      %355 = vmatprep.subr.mxu0 %v308
      %356 = vmatpush1.msra.mxu0 %v307
      %357 = vmatprep.subr.mxu0 %v312
      %358 = vmatpush1.msra.mxu0 %v311
      %359 = vmatprep.subr.mxu0 %v316
      %360 = vmatpush1.msra.mxu0 %v315
      %361 = vmatprep.subr.mxu0 %v320
      %362 = vmatpush1.msra.mxu0 %v319
      %363 = vmatprep.subr.mxu0 %v324
      %364 = vmatpush1.msra.mxu0 %v323
      %365 = vmatprep.subr.mxu0 0.0
      %366 = vmatpush1.msra.mxu0 0.0
      %367 = vmatprep.subr.mxu0 0.0
      %368 = vmatpush1.msra.mxu0 0.0
      %369 = vmatprep.subr.mxu0 0.0
      %370 = vmatpush1.msra.mxu0 0.0
      %371 = vmatprep.subr.mxu0 0.0
      %372 = vmatpush1.msra.mxu0 0.0
      %373 = vmatprep.subr.mxu0 0.0
      %374 = vmatpush1.msra.mxu0 0.0
      %375 = vmatprep.subr.mxu0 0.0
      %376 = vmatpush1.msra.mxu0 0.0
      %377 = vmatprep.subr.mxu0 0.0
      %378 = vmatpush1.msra.mxu0 0.0
      %379 = vmatprep.subr.mxu0 0.0
      %380 = vmatpush1.msra.mxu0 0.0
      %381 = vmatprep.subr.mxu0 0.0
      %382 = vmatpush1.msra.mxu0 0.0
      %383 = vmatprep.subr.mxu0 0.0
      %384 = vmatpush1.msra.mxu0 0.0
      %385 = vmatprep.subr.mxu0 0.0
      %386 = vmatpush1.msra.mxu0 0.0
      %387 = vmatprep.subr.mxu0 0.0
      %388 = vmatpush1.msra.mxu0 0.0
      %389 = vmatprep.subr.mxu0 0.0
      %390 = vmatpush1.msra.mxu0 0.0
      %391 = vmatprep.subr.mxu0 0.0
      %392 = vmatpush1.msra.mxu0 0.0
      %393 = vmatprep.subr.mxu0 0.0
      %394 = vmatpush1.msra.mxu0 0.0
      %395 = vmatprep.subr.mxu0 0.0
      %396 = vmatpush1.msra.mxu0 0.0
      %397 = vmatprep.mubr.f32.mxu0 0.0
      %398 = vmatmul.mubr.f32.gmra.mrb[0].mxu0 %v327
      %v399 = vpop.f32.mrb[0].mxu0
      %v400 = vadd.f32 0.0, %v399
      %v401 = vpop.f32.mrb[0].mxu0
      %v402 = vadd.f32 0.0, %v401
      %403 = vdwg.mxu0
      %404 = vmatprep.subr.mxu0 %v266
      %405 = vmatpush1.msra.mxu0 %v265
      %406 = vmatprep.subr.mxu0 %v270
      %407 = vmatpush1.msra.mxu0 %v269
      %408 = vmatprep.subr.mxu0 %v274
      %409 = vmatpush1.msra.mxu0 %v273
      %410 = vmatprep.subr.mxu0 %v278
      %411 = vmatpush1.msra.mxu0 %v277
      %412 = vmatprep.subr.mxu0 %v282
      %413 = vmatpush1.msra.mxu0 %v281
      %414 = vmatprep.subr.mxu0 %v286
      %415 = vmatpush1.msra.mxu0 %v285
      %416 = vmatprep.subr.mxu0 %v290
      %417 = vmatpush1.msra.mxu0 %v289
      %418 = vmatprep.subr.mxu0 %v294
      %419 = vmatpush1.msra.mxu0 %v293
      %420 = vmatprep.subr.mxu0 %v298
      %421 = vmatpush1.msra.mxu0 %v297
      %422 = vmatprep.subr.mxu0 %v302
      %423 = vmatpush1.msra.mxu0 %v301
      %424 = vmatprep.subr.mxu0 %v306
      %425 = vmatpush1.msra.mxu0 %v305
      %426 = vmatprep.subr.mxu0 %v310
      %427 = vmatpush1.msra.mxu0 %v309
      %428 = vmatprep.subr.mxu0 %v314
      %429 = vmatpush1.msra.mxu0 %v313
      %430 = vmatprep.subr.mxu0 %v318
      %431 = vmatpush1.msra.mxu0 %v317
      %432 = vmatprep.subr.mxu0 %v322
      %433 = vmatpush1.msra.mxu0 %v321
      %434 = vmatprep.subr.mxu0 %v326
      %435 = vmatpush1.msra.mxu0 %v325
      %436 = vmatprep.subr.mxu0 0.0
      %437 = vmatpush1.msra.mxu0 0.0
      %438 = vmatprep.subr.mxu0 0.0
      %439 = vmatpush1.msra.mxu0 0.0
      %440 = vmatprep.subr.mxu0 0.0
      %441 = vmatpush1.msra.mxu0 0.0
      %442 = vmatprep.subr.mxu0 0.0
      %443 = vmatpush1.msra.mxu0 0.0
      %444 = vmatprep.subr.mxu0 0.0
      %445 = vmatpush1.msra.mxu0 0.0
      %446 = vmatprep.subr.mxu0 0.0
      %447 = vmatpush1.msra.mxu0 0.0
      %448 = vmatprep.subr.mxu0 0.0
      %449 = vmatpush1.msra.mxu0 0.0
      %450 = vmatprep.subr.mxu0 0.0
      %451 = vmatpush1.msra.mxu0 0.0
      %452 = vmatprep.subr.mxu0 0.0
      %453 = vmatpush1.msra.mxu0 0.0
      %454 = vmatprep.subr.mxu0 0.0
      %455 = vmatpush1.msra.mxu0 0.0
      %456 = vmatprep.subr.mxu0 0.0
      %457 = vmatpush1.msra.mxu0 0.0
      %458 = vmatprep.subr.mxu0 0.0
      %459 = vmatpush1.msra.mxu0 0.0
      %460 = vmatprep.subr.mxu0 0.0
      %461 = vmatpush1.msra.mxu0 0.0
      %462 = vmatprep.subr.mxu0 0.0
      %463 = vmatpush1.msra.mxu0 0.0
      %464 = vmatprep.subr.mxu0 0.0
      %465 = vmatpush1.msra.mxu0 0.0
      %466 = vmatprep.subr.mxu0 0.0
      %467 = vmatpush1.msra.mxu0 0.0
      %468 = vmatprep.mubr.f32.mxu0 0.0
      %469 = vmatmul.mubr.f32.gmra.mrb[0].mxu0 %v327
      %v470 = vpop.f32.mrb[0].mxu0
      %v471 = vadd.f32 0.0, %v470
      %v472 = vpop.f32.mrb[0].mxu0
      %v473 = vadd.f32 0.0, %v472
      %474 = vdwg.mxu0
      %v475 = vadd.f32 %v329, %v400
      %v476 = vadd.f32 %v330, %v402
      %v477 = vadd.f32 %v331, %v471
      %v478 = vadd.f32 %v332, %v473
      %v479 = vmul.f32 %v475, 0.5
      %v480 = vtanh.pop %v479
      %v481 = vmul.f32 %v480, 0.5
      %v482 = vadd.f32 %v481, 0.5
      %v483 = vmul.f32 %v476, 0.5
      %v484 = vtanh.pop %v483
      %v485 = vmul.f32 %v484, 0.5
      %v486 = vadd.f32 %v485, 0.5
      %v487 = vtanh.pop %v477
      %v488 = vmul.f32 %v478, 0.5
      %v489 = vtanh.pop %v488
      %v490 = vmul.f32 %v489, 0.5
      %v491 = vadd.f32 %v490, 0.5
      %v492 = vmul.f32 %v486, %v328
      %v493 = vmul.f32 %v482, %v487
      %v494 = vadd.f32 %v492, %v493
      %v495 = vtanh.pop %v494
      %v496 = vmul.f32 %v491, %v495
      %v497 = vstv %s261
      %vm498 = vcmp.lt.s32.totalorder %v497, %v262
      %v499 = vsel %vm498, 1, 0
      %500 = vset.pattern.permute.xlu0 0
      %501 = vperm.xlu0 %500, %v499
      %v502 = vpop.permute.xlu0 %501
      %vm503 = vcmp.eq.s32.totalorder %v502, 1
      %v504 = vsel %vm503, %v496, %v327
      %v505 = vsel %vm503, %v494, %v328
      %s506 = sadd.s32 %s261, 1
      %s507 = scalar_lea.vmem %s245, 32
      %v508 = vld [vmem:[%s507] sm:$0xff]
      %v509 = vld [vmem:[%s507 + $0x8] sm:$0xff]
      %v510 = vld [vmem:[%s507 + $0x10] sm:$0xff]
      %v511 = vld [vmem:[%s507 + $0x18] sm:$0xff]
      %512 = vmatprep.subr.mxu0 %v264
      %513 = vmatpush1.msra.mxu0 %v263
      %514 = vmatprep.subr.mxu0 %v268
      %515 = vmatpush1.msra.mxu0 %v267
      %516 = vmatprep.subr.mxu0 %v272
      %517 = vmatpush1.msra.mxu0 %v271
      %518 = vmatprep.subr.mxu0 %v276
      %519 = vmatpush1.msra.mxu0 %v275
      %520 = vmatprep.subr.mxu0 %v280
      %521 = vmatpush1.msra.mxu0 %v279
      %522 = vmatprep.subr.mxu0 %v284
      %523 = vmatpush1.msra.mxu0 %v283
      %524 = vmatprep.subr.mxu0 %v288
      %525 = vmatpush1.msra.mxu0 %v287
      %526 = vmatprep.subr.mxu0 %v292
      %527 = vmatpush1.msra.mxu0 %v291
      %528 = vmatprep.subr.mxu0 %v296
      %529 = vmatpush1.msra.mxu0 %v295
      %530 = vmatprep.subr.mxu0 %v300
      %531 = vmatpush1.msra.mxu0 %v299
      %532 = vmatprep.subr.mxu0 %v304
      %533 = vmatpush1.msra.mxu0 %v303
      %534 = vmatprep.subr.mxu0 %v308
      %535 = vmatpush1.msra.mxu0 %v307
      %536 = vmatprep.subr.mxu0 %v312
      %537 = vmatpush1.msra.mxu0 %v311
      %538 = vmatprep.subr.mxu0 %v316
      %539 = vmatpush1.msra.mxu0 %v315
      %540 = vmatprep.subr.mxu0 %v320
      %541 = vmatpush1.msra.mxu0 %v319
      %542 = vmatprep.subr.mxu0 %v324
      %543 = vmatpush1.msra.mxu0 %v323
      %544 = vmatprep.subr.mxu0 0.0
      %545 = vmatpush1.msra.mxu0 0.0
      %546 = vmatprep.subr.mxu0 0.0
      %547 = vmatpush1.msra.mxu0 0.0
      %548 = vmatprep.subr.mxu0 0.0
      %549 = vmatpush1.msra.mxu0 0.0
      %550 = vmatprep.subr.mxu0 0.0
      %551 = vmatpush1.msra.mxu0 0.0
      %552 = vmatprep.subr.mxu0 0.0
      %553 = vmatpush1.msra.mxu0 0.0
      %554 = vmatprep.subr.mxu0 0.0
      %555 = vmatpush1.msra.mxu0 0.0
      %556 = vmatprep.subr.mxu0 0.0
      %557 = vmatpush1.msra.mxu0 0.0
      %558 = vmatprep.subr.mxu0 0.0
      %559 = vmatpush1.msra.mxu0 0.0
      %560 = vmatprep.subr.mxu0 0.0
      %561 = vmatpush1.msra.mxu0 0.0
      %562 = vmatprep.subr.mxu0 0.0
      %563 = vmatpush1.msra.mxu0 0.0
      %564 = vmatprep.subr.mxu0 0.0
      %565 = vmatpush1.msra.mxu0 0.0
      %566 = vmatprep.subr.mxu0 0.0
      %567 = vmatpush1.msra.mxu0 0.0
      %568 = vmatprep.subr.mxu0 0.0
      %569 = vmatpush1.msra.mxu0 0.0
      %570 = vmatprep.subr.mxu0 0.0
      %571 = vmatpush1.msra.mxu0 0.0
      %572 = vmatprep.subr.mxu0 0.0
      %573 = vmatpush1.msra.mxu0 0.0
      %574 = vmatprep.subr.mxu0 0.0
      %575 = vmatpush1.msra.mxu0 0.0
      %576 = vmatprep.mubr.f32.mxu0 0.0
      %577 = vmatmul.mubr.f32.gmra.mrb[0].mxu0 %v504
      %v578 = vpop.f32.mrb[0].mxu0
      %v579 = vadd.f32 0.0, %v578
      %v580 = vpop.f32.mrb[0].mxu0
      %v581 = vadd.f32 0.0, %v580
      %582 = vdwg.mxu0
      %583 = vmatprep.subr.mxu0 %v266
      %584 = vmatpush1.msra.mxu0 %v265
      %585 = vmatprep.subr.mxu0 %v270
      %586 = vmatpush1.msra.mxu0 %v269
      %587 = vmatprep.subr.mxu0 %v274
      %588 = vmatpush1.msra.mxu0 %v273
      %589 = vmatprep.subr.mxu0 %v278
      %590 = vmatpush1.msra.mxu0 %v277
      %591 = vmatprep.subr.mxu0 %v282
      %592 = vmatpush1.msra.mxu0 %v281
      %593 = vmatprep.subr.mxu0 %v286
      %594 = vmatpush1.msra.mxu0 %v285
      %595 = vmatprep.subr.mxu0 %v290
      %596 = vmatpush1.msra.mxu0 %v289
      %597 = vmatprep.subr.mxu0 %v294
      %598 = vmatpush1.msra.mxu0 %v293
      %599 = vmatprep.subr.mxu0 %v298
      %600 = vmatpush1.msra.mxu0 %v297
      %601 = vmatprep.subr.mxu0 %v302
      %602 = vmatpush1.msra.mxu0 %v301
      %603 = vmatprep.subr.mxu0 %v306
      %604 = vmatpush1.msra.mxu0 %v305
      %605 = vmatprep.subr.mxu0 %v310
      %606 = vmatpush1.msra.mxu0 %v309
      %607 = vmatprep.subr.mxu0 %v314
      %608 = vmatpush1.msra.mxu0 %v313
      %609 = vmatprep.subr.mxu0 %v318
      %610 = vmatpush1.msra.mxu0 %v317
      %611 = vmatprep.subr.mxu0 %v322
      %612 = vmatpush1.msra.mxu0 %v321
      %613 = vmatprep.subr.mxu0 %v326
      %614 = vmatpush1.msra.mxu0 %v325
      %615 = vmatprep.subr.mxu0 0.0
      %616 = vmatpush1.msra.mxu0 0.0
      %617 = vmatprep.subr.mxu0 0.0
      %618 = vmatpush1.msra.mxu0 0.0
      %619 = vmatprep.subr.mxu0 0.0
      %620 = vmatpush1.msra.mxu0 0.0
      %621 = vmatprep.subr.mxu0 0.0
      %622 = vmatpush1.msra.mxu0 0.0
      %623 = vmatprep.subr.mxu0 0.0
      %624 = vmatpush1.msra.mxu0 0.0
      %625 = vmatprep.subr.mxu0 0.0
      %626 = vmatpush1.msra.mxu0 0.0
      %627 = vmatprep.subr.mxu0 0.0
      %628 = vmatpush1.msra.mxu0 0.0
      %629 = vmatprep.subr.mxu0 0.0
      %630 = vmatpush1.msra.mxu0 0.0
      %631 = vmatprep.subr.mxu0 0.0
      %632 = vmatpush1.msra.mxu0 0.0
      %633 = vmatprep.subr.mxu0 0.0
      %634 = vmatpush1.msra.mxu0 0.0
      %635 = vmatprep.subr.mxu0 0.0
      %636 = vmatpush1.msra.mxu0 0.0
      %637 = vmatprep.subr.mxu0 0.0
      %638 = vmatpush1.msra.mxu0 0.0
      %639 = vmatprep.subr.mxu0 0.0
      %640 = vmatpush1.msra.mxu0 0.0
      %641 = vmatprep.subr.mxu0 0.0
      %642 = vmatpush1.msra.mxu0 0.0
      %643 = vmatprep.subr.mxu0 0.0
      %644 = vmatpush1.msra.mxu0 0.0
      %645 = vmatprep.subr.mxu0 0.0
      %646 = vmatpush1.msra.mxu0 0.0
      %647 = vmatprep.mubr.f32.mxu0 0.0
      %648 = vmatmul.mubr.f32.gmra.mrb[0].mxu0 %v504
      %v649 = vpop.f32.mrb[0].mxu0
      %v650 = vadd.f32 0.0, %v649
      %v651 = vpop.f32.mrb[0].mxu0
      %v652 = vadd.f32 0.0, %v651
      %653 = vdwg.mxu0
      %v654 = vadd.f32 %v508, %v579
      %v655 = vadd.f32 %v509, %v581
      %v656 = vadd.f32 %v510, %v650
      %v657 = vadd.f32 %v511, %v652
      %v658 = vmul.f32 %v654, 0.5
      %v659 = vtanh.pop %v658
      %v660 = vmul.f32 %v659, 0.5
      %v661 = vadd.f32 %v660, 0.5
      %v662 = vmul.f32 %v655, 0.5
      %v663 = vtanh.pop %v662
      %v664 = vmul.f32 %v663, 0.5
      %v665 = vadd.f32 %v664, 0.5
      %v666 = vtanh.pop %v656
      %v667 = vmul.f32 %v657, 0.5
      %v668 = vtanh.pop %v667
      %v669 = vmul.f32 %v668, 0.5
      %v670 = vadd.f32 %v669, 0.5
      %v671 = vmul.f32 %v665, %v505
      %v672 = vmul.f32 %v661, %v666
      %v673 = vadd.f32 %v671, %v672
      %v674 = vtanh.pop %v673
      %v675 = vmul.f32 %v670, %v674
      %v676 = vstv %s506
      %vm677 = vcmp.lt.s32.totalorder %v676, %v262
      %v678 = vsel %vm677, 1, 0
      %679 = vset.pattern.permute.xlu0 0
      %680 = vperm.xlu0 %679, %v678
      %v681 = vpop.permute.xlu0 %680
      %vm682 = vcmp.eq.s32.totalorder %v681, 1
      %v683 = vsel %vm682, %v675, %v504
      %v684 = vsel %vm682, %v673, %v505
      %s685 = sadd.s32 %s261, 2
      %s686 = scalar_lea.vmem %s245, 64
      %v687 = vld [vmem:[%s686] sm:$0xff]
      %v688 = vld [vmem:[%s686 + $0x8] sm:$0xff]
      %v689 = vld [vmem:[%s686 + $0x10] sm:$0xff]
      %v690 = vld [vmem:[%s686 + $0x18] sm:$0xff]
      %691 = vmatprep.subr.mxu0 %v264
      %692 = vmatpush1.msra.mxu0 %v263
      %693 = vmatprep.subr.mxu0 %v268
      %694 = vmatpush1.msra.mxu0 %v267
      %695 = vmatprep.subr.mxu0 %v272
      %696 = vmatpush1.msra.mxu0 %v271
      %697 = vmatprep.subr.mxu0 %v276
      %698 = vmatpush1.msra.mxu0 %v275
      %699 = vmatprep.subr.mxu0 %v280
      %700 = vmatpush1.msra.mxu0 %v279
      %701 = vmatprep.subr.mxu0 %v284
      %702 = vmatpush1.msra.mxu0 %v283
      %703 = vmatprep.subr.mxu0 %v288
      %704 = vmatpush1.msra.mxu0 %v287
      %705 = vmatprep.subr.mxu0 %v292
      %706 = vmatpush1.msra.mxu0 %v291
      %707 = vmatprep.subr.mxu0 %v296
      %708 = vmatpush1.msra.mxu0 %v295
      %709 = vmatprep.subr.mxu0 %v300
      %710 = vmatpush1.msra.mxu0 %v299
      %711 = vmatprep.subr.mxu0 %v304
      %712 = vmatpush1.msra.mxu0 %v303
      %713 = vmatprep.subr.mxu0 %v308
      %714 = vmatpush1.msra.mxu0 %v307
      %715 = vmatprep.subr.mxu0 %v312
      %716 = vmatpush1.msra.mxu0 %v311
      %717 = vmatprep.subr.mxu0 %v316
      %718 = vmatpush1.msra.mxu0 %v315
      %719 = vmatprep.subr.mxu0 %v320
      %720 = vmatpush1.msra.mxu0 %v319
      %721 = vmatprep.subr.mxu0 %v324
      %722 = vmatpush1.msra.mxu0 %v323
      %723 = vmatprep.subr.mxu0 0.0
      %724 = vmatpush1.msra.mxu0 0.0
      %725 = vmatprep.subr.mxu0 0.0
      %726 = vmatpush1.msra.mxu0 0.0
      %727 = vmatprep.subr.mxu0 0.0
      %728 = vmatpush1.msra.mxu0 0.0
      %729 = vmatprep.subr.mxu0 0.0
      %730 = vmatpush1.msra.mxu0 0.0
      %731 = vmatprep.subr.mxu0 0.0
      %732 = vmatpush1.msra.mxu0 0.0
      %733 = vmatprep.subr.mxu0 0.0
      %734 = vmatpush1.msra.mxu0 0.0
      %735 = vmatprep.subr.mxu0 0.0
      %736 = vmatpush1.msra.mxu0 0.0
      %737 = vmatprep.subr.mxu0 0.0
      %738 = vmatpush1.msra.mxu0 0.0
      %739 = vmatprep.subr.mxu0 0.0
      %740 = vmatpush1.msra.mxu0 0.0
      %741 = vmatprep.subr.mxu0 0.0
      %742 = vmatpush1.msra.mxu0 0.0
      %743 = vmatprep.subr.mxu0 0.0
      %744 = vmatpush1.msra.mxu0 0.0
      %745 = vmatprep.subr.mxu0 0.0
      %746 = vmatpush1.msra.mxu0 0.0
      %747 = vmatprep.subr.mxu0 0.0
      %748 = vmatpush1.msra.mxu0 0.0
      %749 = vmatprep.subr.mxu0 0.0
      %750 = vmatpush1.msra.mxu0 0.0
      %751 = vmatprep.subr.mxu0 0.0
      %752 = vmatpush1.msra.mxu0 0.0
      %753 = vmatprep.subr.mxu0 0.0
      %754 = vmatpush1.msra.mxu0 0.0
      %755 = vmatprep.mubr.f32.mxu0 0.0
      %756 = vmatmul.mubr.f32.gmra.mrb[0].mxu0 %v683
      %v757 = vpop.f32.mrb[0].mxu0
      %v758 = vadd.f32 0.0, %v757
      %v759 = vpop.f32.mrb[0].mxu0
      %v760 = vadd.f32 0.0, %v759
      %761 = vdwg.mxu0
      %762 = vmatprep.subr.mxu0 %v266
      %763 = vmatpush1.msra.mxu0 %v265
      %764 = vmatprep.subr.mxu0 %v270
      %765 = vmatpush1.msra.mxu0 %v269
      %766 = vmatprep.subr.mxu0 %v274
      %767 = vmatpush1.msra.mxu0 %v273
      %768 = vmatprep.subr.mxu0 %v278
      %769 = vmatpush1.msra.mxu0 %v277
      %770 = vmatprep.subr.mxu0 %v282
      %771 = vmatpush1.msra.mxu0 %v281
      %772 = vmatprep.subr.mxu0 %v286
      %773 = vmatpush1.msra.mxu0 %v285
      %774 = vmatprep.subr.mxu0 %v290
      %775 = vmatpush1.msra.mxu0 %v289
      %776 = vmatprep.subr.mxu0 %v294
      %777 = vmatpush1.msra.mxu0 %v293
      %778 = vmatprep.subr.mxu0 %v298
      %779 = vmatpush1.msra.mxu0 %v297
      %780 = vmatprep.subr.mxu0 %v302
      %781 = vmatpush1.msra.mxu0 %v301
      %782 = vmatprep.subr.mxu0 %v306
      %783 = vmatpush1.msra.mxu0 %v305
      %784 = vmatprep.subr.mxu0 %v310
      %785 = vmatpush1.msra.mxu0 %v309
      %786 = vmatprep.subr.mxu0 %v314
      %787 = vmatpush1.msra.mxu0 %v313
      %788 = vmatprep.subr.mxu0 %v318
      %789 = vmatpush1.msra.mxu0 %v317
      %790 = vmatprep.subr.mxu0 %v322
      %791 = vmatpush1.msra.mxu0 %v321
      %792 = vmatprep.subr.mxu0 %v326
      %793 = vmatpush1.msra.mxu0 %v325
      %794 = vmatprep.subr.mxu0 0.0
      %795 = vmatpush1.msra.mxu0 0.0
      %796 = vmatprep.subr.mxu0 0.0
      %797 = vmatpush1.msra.mxu0 0.0
      %798 = vmatprep.subr.mxu0 0.0
      %799 = vmatpush1.msra.mxu0 0.0
      %800 = vmatprep.subr.mxu0 0.0
      %801 = vmatpush1.msra.mxu0 0.0
      %802 = vmatprep.subr.mxu0 0.0
      %803 = vmatpush1.msra.mxu0 0.0
      %804 = vmatprep.subr.mxu0 0.0
      %805 = vmatpush1.msra.mxu0 0.0
      %806 = vmatprep.subr.mxu0 0.0
      %807 = vmatpush1.msra.mxu0 0.0
      %808 = vmatprep.subr.mxu0 0.0
      %809 = vmatpush1.msra.mxu0 0.0
      %810 = vmatprep.subr.mxu0 0.0
      %811 = vmatpush1.msra.mxu0 0.0
      %812 = vmatprep.subr.mxu0 0.0
      %813 = vmatpush1.msra.mxu0 0.0
      %814 = vmatprep.subr.mxu0 0.0
      %815 = vmatpush1.msra.mxu0 0.0
      %816 = vmatprep.subr.mxu0 0.0
      %817 = vmatpush1.msra.mxu0 0.0
      %818 = vmatprep.subr.mxu0 0.0
      %819 = vmatpush1.msra.mxu0 0.0
      %820 = vmatprep.subr.mxu0 0.0
      %821 = vmatpush1.msra.mxu0 0.0
      %822 = vmatprep.subr.mxu0 0.0
      %823 = vmatpush1.msra.mxu0 0.0
      %824 = vmatprep.subr.mxu0 0.0
      %825 = vmatpush1.msra.mxu0 0.0
      %826 = vmatprep.mubr.f32.mxu0 0.0
      %827 = vmatmul.mubr.f32.gmra.mrb[0].mxu0 %v683
      %v828 = vpop.f32.mrb[0].mxu0
      %v829 = vadd.f32 0.0, %v828
      %v830 = vpop.f32.mrb[0].mxu0
      %v831 = vadd.f32 0.0, %v830
      %832 = vdwg.mxu0
      %v833 = vadd.f32 %v687, %v758
      %v834 = vadd.f32 %v688, %v760
      %v835 = vadd.f32 %v689, %v829
      %v836 = vadd.f32 %v690, %v831
      %v837 = vmul.f32 %v833, 0.5
      %v838 = vtanh.pop %v837
      %v839 = vmul.f32 %v838, 0.5
      %v840 = vadd.f32 %v839, 0.5
      %v841 = vmul.f32 %v834, 0.5
      %v842 = vtanh.pop %v841
      %v843 = vmul.f32 %v842, 0.5
      %v844 = vadd.f32 %v843, 0.5
      %v845 = vtanh.pop %v835
      %v846 = vmul.f32 %v836, 0.5
      %v847 = vtanh.pop %v846
      %v848 = vmul.f32 %v847, 0.5
      %v849 = vadd.f32 %v848, 0.5
      %v850 = vmul.f32 %v844, %v684
      %v851 = vmul.f32 %v840, %v845
      %v852 = vadd.f32 %v850, %v851
      %v853 = vtanh.pop %v852
      %v854 = vmul.f32 %v849, %v853
      %v855 = vstv %s685
      %vm856 = vcmp.lt.s32.totalorder %v855, %v262
      %v857 = vsel %vm856, 1, 0
      %858 = vset.pattern.permute.xlu0 0
      %859 = vperm.xlu0 %858, %v857
      %v860 = vpop.permute.xlu0 %859
      %vm861 = vcmp.eq.s32.totalorder %v860, 1
      %v862 = vsel %vm861, %v854, %v683
      %v863 = vsel %vm861, %v852, %v684
      %s864 = sadd.s32 %s261, 3
      %s865 = scalar_lea.vmem %s245, 96
      %v866 = vld [vmem:[%s865] sm:$0xff]
      %v867 = vld [vmem:[%s865 + $0x8] sm:$0xff]
      %v868 = vld [vmem:[%s865 + $0x10] sm:$0xff]
      %v869 = vld [vmem:[%s865 + $0x18] sm:$0xff]
      %870 = vmatprep.subr.mxu0 %v264
      %871 = vmatpush1.msra.mxu0 %v263
      %872 = vmatprep.subr.mxu0 %v268
      %873 = vmatpush1.msra.mxu0 %v267
      %874 = vmatprep.subr.mxu0 %v272
      %875 = vmatpush1.msra.mxu0 %v271
      %876 = vmatprep.subr.mxu0 %v276
      %877 = vmatpush1.msra.mxu0 %v275
      %878 = vmatprep.subr.mxu0 %v280
      %879 = vmatpush1.msra.mxu0 %v279
      %880 = vmatprep.subr.mxu0 %v284
      %881 = vmatpush1.msra.mxu0 %v283
      %882 = vmatprep.subr.mxu0 %v288
      %883 = vmatpush1.msra.mxu0 %v287
      %884 = vmatprep.subr.mxu0 %v292
      %885 = vmatpush1.msra.mxu0 %v291
      %886 = vmatprep.subr.mxu0 %v296
      %887 = vmatpush1.msra.mxu0 %v295
      %888 = vmatprep.subr.mxu0 %v300
      %889 = vmatpush1.msra.mxu0 %v299
      %890 = vmatprep.subr.mxu0 %v304
      %891 = vmatpush1.msra.mxu0 %v303
      %892 = vmatprep.subr.mxu0 %v308
      %893 = vmatpush1.msra.mxu0 %v307
      %894 = vmatprep.subr.mxu0 %v312
      %895 = vmatpush1.msra.mxu0 %v311
      %896 = vmatprep.subr.mxu0 %v316
      %897 = vmatpush1.msra.mxu0 %v315
      %898 = vmatprep.subr.mxu0 %v320
      %899 = vmatpush1.msra.mxu0 %v319
      %900 = vmatprep.subr.mxu0 %v324
      %901 = vmatpush1.msra.mxu0 %v323
      %902 = vmatprep.subr.mxu0 0.0
      %903 = vmatpush1.msra.mxu0 0.0
      %904 = vmatprep.subr.mxu0 0.0
      %905 = vmatpush1.msra.mxu0 0.0
      %906 = vmatprep.subr.mxu0 0.0
      %907 = vmatpush1.msra.mxu0 0.0
      %908 = vmatprep.subr.mxu0 0.0
      %909 = vmatpush1.msra.mxu0 0.0
      %910 = vmatprep.subr.mxu0 0.0
      %911 = vmatpush1.msra.mxu0 0.0
      %912 = vmatprep.subr.mxu0 0.0
      %913 = vmatpush1.msra.mxu0 0.0
      %914 = vmatprep.subr.mxu0 0.0
      %915 = vmatpush1.msra.mxu0 0.0
      %916 = vmatprep.subr.mxu0 0.0
      %917 = vmatpush1.msra.mxu0 0.0
      %918 = vmatprep.subr.mxu0 0.0
      %919 = vmatpush1.msra.mxu0 0.0
      %920 = vmatprep.subr.mxu0 0.0
      %921 = vmatpush1.msra.mxu0 0.0
      %922 = vmatprep.subr.mxu0 0.0
      %923 = vmatpush1.msra.mxu0 0.0
      %924 = vmatprep.subr.mxu0 0.0
      %925 = vmatpush1.msra.mxu0 0.0
      %926 = vmatprep.subr.mxu0 0.0
      %927 = vmatpush1.msra.mxu0 0.0
      %928 = vmatprep.subr.mxu0 0.0
      %929 = vmatpush1.msra.mxu0 0.0
      %930 = vmatprep.subr.mxu0 0.0
      %931 = vmatpush1.msra.mxu0 0.0
      %932 = vmatprep.subr.mxu0 0.0
      %933 = vmatpush1.msra.mxu0 0.0
      %934 = vmatprep.mubr.f32.mxu0 0.0
      %935 = vmatmul.mubr.f32.gmra.mrb[0].mxu0 %v862
      %v936 = vpop.f32.mrb[0].mxu0
      %v937 = vadd.f32 0.0, %v936
      %v938 = vpop.f32.mrb[0].mxu0
      %v939 = vadd.f32 0.0, %v938
      %940 = vdwg.mxu0
      %941 = vmatprep.subr.mxu0 %v266
      %942 = vmatpush1.msra.mxu0 %v265
      %943 = vmatprep.subr.mxu0 %v270
      %944 = vmatpush1.msra.mxu0 %v269
      %945 = vmatprep.subr.mxu0 %v274
      %946 = vmatpush1.msra.mxu0 %v273
      %947 = vmatprep.subr.mxu0 %v278
      %948 = vmatpush1.msra.mxu0 %v277
      %949 = vmatprep.subr.mxu0 %v282
      %950 = vmatpush1.msra.mxu0 %v281
      %951 = vmatprep.subr.mxu0 %v286
      %952 = vmatpush1.msra.mxu0 %v285
      %953 = vmatprep.subr.mxu0 %v290
      %954 = vmatpush1.msra.mxu0 %v289
      %955 = vmatprep.subr.mxu0 %v294
      %956 = vmatpush1.msra.mxu0 %v293
      %957 = vmatprep.subr.mxu0 %v298
      %958 = vmatpush1.msra.mxu0 %v297
      %959 = vmatprep.subr.mxu0 %v302
      %960 = vmatpush1.msra.mxu0 %v301
      %961 = vmatprep.subr.mxu0 %v306
      %962 = vmatpush1.msra.mxu0 %v305
      %963 = vmatprep.subr.mxu0 %v310
      %964 = vmatpush1.msra.mxu0 %v309
      %965 = vmatprep.subr.mxu0 %v314
      %966 = vmatpush1.msra.mxu0 %v313
      %967 = vmatprep.subr.mxu0 %v318
      %968 = vmatpush1.msra.mxu0 %v317
      %969 = vmatprep.subr.mxu0 %v322
      %970 = vmatpush1.msra.mxu0 %v321
      %971 = vmatprep.subr.mxu0 %v326
      %972 = vmatpush1.msra.mxu0 %v325
      %973 = vmatprep.subr.mxu0 0.0
      %974 = vmatpush1.msra.mxu0 0.0
      %975 = vmatprep.subr.mxu0 0.0
      %976 = vmatpush1.msra.mxu0 0.0
      %977 = vmatprep.subr.mxu0 0.0
      %978 = vmatpush1.msra.mxu0 0.0
      %979 = vmatprep.subr.mxu0 0.0
      %980 = vmatpush1.msra.mxu0 0.0
      %981 = vmatprep.subr.mxu0 0.0
      %982 = vmatpush1.msra.mxu0 0.0
      %983 = vmatprep.subr.mxu0 0.0
      %984 = vmatpush1.msra.mxu0 0.0
      %985 = vmatprep.subr.mxu0 0.0
      %986 = vmatpush1.msra.mxu0 0.0
      %987 = vmatprep.subr.mxu0 0.0
      %988 = vmatpush1.msra.mxu0 0.0
      %989 = vmatprep.subr.mxu0 0.0
      %990 = vmatpush1.msra.mxu0 0.0
      %991 = vmatprep.subr.mxu0 0.0
      %992 = vmatpush1.msra.mxu0 0.0
      %993 = vmatprep.subr.mxu0 0.0
      %994 = vmatpush1.msra.mxu0 0.0
      %995 = vmatprep.subr.mxu0 0.0
      %996 = vmatpush1.msra.mxu0 0.0
      %997 = vmatprep.subr.mxu0 0.0
      %998 = vmatpush1.msra.mxu0 0.0
      %999 = vmatprep.subr.mxu0 0.0
      %1000 = vmatpush1.msra.mxu0 0.0
      %1001 = vmatprep.subr.mxu0 0.0
      %1002 = vmatpush1.msra.mxu0 0.0
      %1003 = vmatprep.subr.mxu0 0.0
      %1004 = vmatpush1.msra.mxu0 0.0
      %1005 = vmatprep.mubr.f32.mxu0 0.0
      %1006 = vmatmul.mubr.f32.gmra.mrb[0].mxu0 %v862
      %v1007 = vpop.f32.mrb[0].mxu0
      %v1008 = vadd.f32 0.0, %v1007
      %v1009 = vpop.f32.mrb[0].mxu0
      %v1010 = vadd.f32 0.0, %v1009
      %1011 = vdwg.mxu0
      %v1012 = vadd.f32 %v866, %v937
      %v1013 = vadd.f32 %v867, %v939
      %v1014 = vadd.f32 %v868, %v1008
      %v1015 = vadd.f32 %v869, %v1010
      %v1016 = vmul.f32 %v1012, 0.5
      %v1017 = vtanh.pop %v1016
      %v1018 = vmul.f32 %v1017, 0.5
      %v1019 = vadd.f32 %v1018, 0.5
      %v1020 = vmul.f32 %v1013, 0.5
      %v1021 = vtanh.pop %v1020
      %v1022 = vmul.f32 %v1021, 0.5
      %v1023 = vadd.f32 %v1022, 0.5
      %v1024 = vtanh.pop %v1014
      %v1025 = vmul.f32 %v1015, 0.5
      %v1026 = vtanh.pop %v1025
      %v1027 = vmul.f32 %v1026, 0.5
      %v1028 = vadd.f32 %v1027, 0.5
      %v1029 = vmul.f32 %v1023, %v863
      %v1030 = vmul.f32 %v1019, %v1024
      %v1031 = vadd.f32 %v1029, %v1030
      %v1032 = vtanh.pop %v1031
      %v1033 = vmul.f32 %v1028, %v1032
      %v1034 = vstv %s864
      %vm1035 = vcmp.lt.s32.totalorder %v1034, %v262
      %v1036 = vsel %vm1035, 1, 0
      %1037 = vset.pattern.permute.xlu0 0
      %1038 = vperm.xlu0 %1037, %v1036
      %v1039 = vpop.permute.xlu0 %1038
      %vm1040 = vcmp.eq.s32.totalorder %v1039, 1
      %v1041 = vsel %vm1040, %v1033, %v862
      %v1042 = vsel %vm1040, %v1031, %v863
      %1043 = vst [vmem:[%s250] sm:$0xff] %v1041
      %1044 = vst [vmem:[%s254] sm:$0xff] %v1042
      %p1045 = scmp.lt.s32.totalorder %s20, 0
      %s1046 = scalar_select %p1045, %s20, 0
      %s1047 = smul.addr %s1046, 8
      %s1048 = scalar_lea.vmem %s3, %s1047
      %p1049 = scmp.lt.s32.totalorder %s20, 0
      %s1050 = scalar_select %p1049, %s20, 0
      %s1051 = smul.addr %s1050, 8
      %s1052 = scalar_lea.vmem %s4, %s1051
      // Predicated region
      $region37: #{encoder_forward.1} parent=31 // pred_check
        %p1053 = pneg %p121
      $region38: #{encoder_forward.1} parent=31 // pred_check_branch
        %1055 = sbr.rel (%p1053) target = $region40
      $region39: #{encoder_forward.1} parent=31 // pred_region
        _
      $region40: #{encoder_forward.1} parent=31 // pred_fallthru
        _
      // Predicated region
      $region41: #{encoder_forward.1} parent=31 // pred_check
        %p1056 = pneg %p147
      $region42: #{encoder_forward.1} parent=31 // pred_check_branch
        %1058 = sbr.rel (%p1056) target = $region44
      $region43: #{encoder_forward.1} parent=31 // pred_region
        _
      $region44: #{encoder_forward.1} parent=31 // pred_fallthru
        _
      // Predicated region
      $region45: #{encoder_forward.1} parent=31 // pred_check
        %p1059 = pneg %p121
      $region46: #{encoder_forward.1} parent=31 // pred_check_branch
        %1061 = sbr.rel (%p1059) target = $region48
      $region47: #{encoder_forward.1} parent=31 // pred_region
        %p1062 = scmp.lt.s32.totalorder %s20, 0
        %s1063 = scalar_select %p1062, %s20, 0
        %s1064 = smul.addr %s1063, 8
        %s1065 = scalar_lea.vmem %s3, %s1064
      $region48: #{encoder_forward.1} parent=31 // pred_fallthru
        _
      // Predicated region
      $region49: #{encoder_forward.1} parent=31 // pred_check
        %p1066 = pneg %p147
      $region50: #{encoder_forward.1} parent=31 // pred_check_branch
        %1068 = sbr.rel (%p1066) target = $region52
      $region51: #{encoder_forward.1} parent=31 // pred_region
        %p1069 = scmp.lt.s32.totalorder %s20, 0
        %s1070 = scalar_select %p1069, %s20, 0
        %s1071 = smul.addr %s1070, 8
        %s1072 = scalar_lea.vmem %s4, %s1071
      $region52: #{encoder_forward.1} parent=31 // pred_fallthru
        _
    $region32: #{encoder_forward.1} parent=5 // pred_fallthru
      _
    %p1073 = scmp.le.s32.totalorder 2, %s11
    // Predicated region
    $region53: #{encoder_forward.1} parent=5 // pred_check
      %p1074 = pneg %p1073
    $region54: #{encoder_forward.1} parent=5 // pred_check_branch
      %1076 = sbr.rel (%p1074) target = $region56
    $region55: #{encoder_forward.1} parent=5 // pred_region
      %s1077 = ssub.s32 %s11, 2
    $region56: #{encoder_forward.1} parent=5 // pred_fallthru
      _
  $region6: #{encoder_forward.1} parent=0 // loop_footer
    %s15 = sadd.s32 1, %s11
  $region7: #{encoder_forward.1} parent=0 // loop_footer_branch
    %10 = sbr.rel target = $region3
  $region8: #{encoder_forward.1} parent=0 // loop_exit
    _

</llo_original>
